<compile_context>
chip_gen: v5e
topology: v5e:2x2
jax: 0.10.0
libtpu: 0.0.40
codegen_flags: <defaults>
</compile_context>

<pallas_src>
import jax
import jax.numpy as jnp
from jax import lax
from jax.experimental import pallas as pl

# ----- model configuration: MyTransformer(input_dim=32, output_dim=4,
#       hidden_dim=32, num_layers=2, num_heads=4, dropout=0.1) ----------------
E = 32              # input_dim (d_model)
O = 4               # output_dim
FF = 32             # hidden_dim (dim_feedforward); packing assumes FF == E
L = 2               # num_layers
H = 4               # num_heads
DH = E // H         # head dim
S = 8               # sequence length
B = 2               # batch size
T = S * B           # tokens per invocation (batch folded into rows, r = s*B + b)
OP = 128            # lane-dense padded output width (real outputs: cols [0:O])
MAT_LANES = 128     # mat slab width (row-band-major, each weight at lane 0)
VEC_W = 128         # vec slab width
EPS = 1e-5          # LayerNorm eps (PyTorch default)
NEG = -1e30         # additive mask value for cross-batch attention entries
BIAS_ROW = 3 * L + 2  # row in vec slab where the (T, T) attention-mask band starts


def transformer_kernel(x_ref, mat_ref, vec_ref, o_ref):
    """Whole-batch transformer encoder + padded final fc, one invocation.

    x_ref:   (T, E)  f32          tokens, batch folded into rows
    mat_ref: (L*4*E + E, 128) bf16 row-band-major pre-transposed weights
                                  [wqkv_T | wo_T | w1_T | w2_T] per layer, then wfc_T
    vec_ref: (3*L + 2 + T, 128) f32 biases / LN params / constant attention mask
    o_ref:   (T, OP) f32          lane-dense output (cols [0:O] = fc result)
    """
    x = x_ref[...].astype(jnp.float32)                       # (T, E) residual stream
    attn_bias = vec_ref[BIAS_ROW:BIAS_ROW + T, 0:T]          # (T, T) constant mask

    def layer_norm(v, g, b):
        mu = jnp.mean(v, axis=-1, keepdims=True)
        var = jnp.mean((v - mu) ** 2, axis=-1, keepdims=True)
        return (v - mu) * lax.rsqrt(var + EPS) * g + b

    for l in range(L):                                       # L == 2: unroll
        b0 = l * 4 * E
        wqkv = mat_ref[b0:b0 + E, 0:3 * E]                   # (E, 3E) bf16, Q pre-scaled
        wo   = mat_ref[b0 + E:b0 + 2 * E, 0:E]               # (E, E)   bf16
        w1   = mat_ref[b0 + 2 * E:b0 + 3 * E, 0:FF]          # (E, FF)  bf16
        w2   = mat_ref[b0 + 3 * E:b0 + 4 * E, 0:E]           # (FF, E)  bf16
        v0 = 3 * l
        bqkv = vec_ref[v0:v0 + 1, 0:3 * E]                   # (1, 3E) f32, Q bias pre-scaled
        bo   = vec_ref[v0 + 1:v0 + 2, 0:E]
        b1   = vec_ref[v0 + 1:v0 + 2, E:E + FF]
        b2   = vec_ref[v0 + 1:v0 + 2, E + FF:E + FF + E]
        ln1g = vec_ref[v0 + 2:v0 + 3, 0:E]
        ln1b = vec_ref[v0 + 2:v0 + 3, E:2 * E]
        ln2g = vec_ref[v0 + 2:v0 + 3, 2 * E:3 * E]
        ln2b = vec_ref[v0 + 2:v0 + 3, 3 * E:4 * E]

        # ------- self-attention (register-resident, Wo folded per head) -------
        qkv = jnp.dot(x.astype(jnp.bfloat16), wqkv,
                      preferred_element_type=jnp.float32) + bqkv        # (T, 3E) f32
        q  = qkv[:, 0:E].astype(jnp.bfloat16)                           # (T, E) bf16
        vv = qkv[:, 2 * E:3 * E].astype(jnp.bfloat16)                   # (T, E) bf16
        kT = qkv[:, E:2 * E].T.astype(jnp.bfloat16)                     # (E, T) bf16, one transpose/layer

        attn = jnp.zeros((T, E), jnp.float32)                           # accumulator in vregs
        for h in range(H):                                              # H == 4: unroll
            c0 = h * DH
            s = jnp.dot(q[:, c0:c0 + DH], kT[c0:c0 + DH, :],
                        preferred_element_type=jnp.float32)             # (T, T)
            s = s + attn_bias                                           # mask cross-batch pairs
            s = s - jnp.max(s, axis=-1, keepdims=True)
            p = jnp.exp(s)                                              # unnormalized probs
            inv = pl.reciprocal(jnp.sum(p, axis=-1, keepdims=True), approx=True)
            oh = jnp.dot(p.astype(jnp.bfloat16), vv[:, c0:c0 + DH],
                         preferred_element_type=jnp.float32)            # (T, DH)
            oh = oh * inv                                               # deferred softmax norm
            attn = attn + jnp.dot(oh.astype(jnp.bfloat16), wo[c0:c0 + DH, :],
                                  preferred_element_type=jnp.float32)   # fold Wo per head
        attn = attn + bo
        # dropout1: identity (eval-mode forward)
        x = layer_norm(x + attn, ln1g, ln1b)

        # ------- feed-forward ------------------------------------------------
        hdn = jnp.maximum(
            jnp.dot(x.astype(jnp.bfloat16), w1, preferred_element_type=jnp.float32) + b1,
            0.0)                                                        # ReLU
        ff = jnp.dot(hdn.astype(jnp.bfloat16), w2,
                     preferred_element_type=jnp.float32) + b2
        # dropout2: identity (eval-mode forward)
        x = layer_norm(x + ff, ln2g, ln2b)

    # ------- final fc (nn.Linear(E, O)), padded to OP lanes for a dense store ---
    f0 = L * 4 * E
    wfc = mat_ref[f0:f0 + E, 0:OP]                           # (E, OP) bf16, zeros past O
    bfc = vec_ref[3 * L:3 * L + 1, 0:OP]                     # (1, OP) f32, zeros past O
    out = jnp.dot(x.astype(jnp.bfloat16), wfc, preferred_element_type=jnp.float32) + bfc
    o_ref[...] = out.astype(o_ref.dtype)


def pack_params(params):
    """Pre-transpose weights, fold the softmax scale into Q, pack into 2 slabs.

    mat_slab: (L*4*E + E, 128) bf16, row-band-major (each weight at lane 0).
    vec_slab: (3*L + 2 + T, 128) f32: biases / LN params / bfc / constant mask.
    """
    assert FF == E, "packing layout assumes hidden_dim == input_dim"
    scale = 1.0 / jnp.sqrt(jnp.float32(DH))

    def band(w):  # zero-pad a (rows, cols<=128) block to (rows, MAT_LANES)
        r, c = w.shape
        return jnp.zeros((r, MAT_LANES), jnp.float32).at[:, :c].set(w)

    bands = []
    for l in range(L):
        wqkv_t = params["wqkv"][l].T                              # (E, 3E)
        wqkv_t = wqkv_t.at[:, 0:E].multiply(scale)                # fold 1/sqrt(DH) into Q
        bands += [band(wqkv_t), band(params["wo"][l].T),
                  band(params["w1"][l].T), band(params["w2"][l].T)]
    bands.append(band(params["wfc"].T))                           # (E, O) zero-padded fc
    mat_slab = jnp.concatenate(bands, axis=0).astype(jnp.bfloat16)  # (L*4*E + E, 128)

    def vrow(*pieces):
        v = jnp.concatenate([p.reshape(-1) for p in pieces])
        return jnp.zeros((VEC_W,), jnp.float32).at[:v.shape[0]].set(v)

    vec_rows = []
    for l in range(L):
        bqkv = params["bqkv"][l].at[0:E].multiply(scale)          # fold scale into Q bias
        vec_rows.append(vrow(bqkv))
        vec_rows.append(vrow(params["bo"][l], params["b1"][l], params["b2"][l]))
        vec_rows.append(vrow(params["ln1g"][l], params["ln1b"][l],
                             params["ln2g"][l], params["ln2b"][l]))
    vec_rows.append(vrow(params["bfc"]))                          # row 3*L
    vec_rows.append(jnp.zeros((VEC_W,), jnp.float32))             # pad -> BIAS_ROW rows
    head = jnp.stack(vec_rows, axis=0)                            # (3*L + 2, 128)

    # Constant cross-batch attention mask band (row r belongs to batch r % B).
    rb = jnp.arange(T)[:, None] % B
    cb = jnp.arange(T)[None, :] % B
    bias = jnp.where(rb == cb, 0.0, NEG).astype(jnp.float32)      # (T, T)
    bias_band = jnp.zeros((T, VEC_W), jnp.float32).at[:, :T].set(bias)
    vec_slab = jnp.concatenate([head, bias_band], axis=0)         # (3*L + 2 + T, 128)
    return mat_slab, vec_slab


@jax.jit
def my_transformer_forward(x_sbe, mat_slab, vec_slab):
    """x_sbe: (S, B, E) float32 (PyTorch seq-major layout). Returns (S, B, O)."""
    x_tokens = x_sbe.reshape(T, E)               # free collapse; row = s*B + b
    out_pad = pl.pallas_call(
        transformer_kernel,
        out_shape=jax.ShapeDtypeStruct((T, OP), jnp.float32),
    )(x_tokens, mat_slab, vec_slab)
    return out_pad[:, :O].reshape(S, B, O)       # free reshape back to (S, B, O)


def init_params(key):
    ks = jax.random.split(key, 8)

    def rnd(k, shape, scale=0.05):
        return jax.random.normal(k, shape, jnp.float32) * scale

    return {
        # MultiheadAttention in-proj / out-proj (PyTorch parameter shapes)
        "wqkv": rnd(ks[0], (L, 3 * E, E)),
        "bqkv": jnp.zeros((L, 3 * E), jnp.float32),
        "wo":   rnd(ks[1], (L, E, E)),
        "bo":   jnp.zeros((L, E), jnp.float32),
        # LayerNorms (weight=1, bias=0 at init, like PyTorch)
        "ln1g": jnp.ones((L, E), jnp.float32),
        "ln1b": jnp.zeros((L, E), jnp.float32),
        "ln2g": jnp.ones((L, E), jnp.float32),
        "ln2b": jnp.zeros((L, E), jnp.float32),
        # Feed-forward linear1 / linear2
        "w1":   rnd(ks[2], (L, FF, E)),
        "b1":   jnp.zeros((L, FF), jnp.float32),
        "w2":   rnd(ks[3], (L, E, FF)),
        "b2":   jnp.zeros((L, E), jnp.float32),
        # Final fc: nn.Linear(input_dim, output_dim)
        "wfc":  rnd(ks[4], (O, E)),
        "bfc":  rnd(ks[5], (O,)),
    }


if __name__ == "__main__":
    key = jax.random.PRNGKey(0)
    k_param, k_x = jax.random.split(key)

    params = init_params(k_param)
    mat_slab, vec_slab = pack_params(params)     # packed once, outside the hot path

    # PyTorch default convention for nn.Transformer: (seq_len, batch, d_model)
    x = jax.random.normal(k_x, (S, B, E), jnp.float32)

    out = my_transformer_forward(x, mat_slab, vec_slab)
    out = jax.block_until_ready(out)

    assert out.shape == (S, B, O), out.shape
    print("KERNEL_OK")
</pallas_src>

<mosaic_0001>
module attributes {stable_mosaic.version = 11 : i64} {
  func.func @transformer_kernel(%arg0: memref<16x32xf32, #tpu.memory_space<vmem>>, %arg1: memref<288x128xbf16, #tpu.memory_space<vmem>>, %arg2: memref<24x128xf32, #tpu.memory_space<vmem>>, %arg3: memref<16x128xf32, #tpu.memory_space<vmem>>) attributes {dimension_semantics = [], scalar_prefetch = 0 : i64, scratch_operands = 0 : i64, tpu.core_type = #tpu.core_type<tc>} {
    %c0 = arith.constant 0 : index
    %c0_0 = arith.constant 0 : index
    %0 = vector.load %arg0[%c0, %c0_0] : memref<16x32xf32, #tpu.memory_space<vmem>>, vector<16x32xf32>
    %c8 = arith.constant 8 : index
    %c0_1 = arith.constant 0 : index
    %1 = vector.load %arg2[%c8, %c0_1] : memref<24x128xf32, #tpu.memory_space<vmem>>, vector<16x16xf32>
    %c0_2 = arith.constant 0 : index
    %c0_3 = arith.constant 0 : index
    %2 = vector.load %arg1[%c0_2, %c0_3] : memref<288x128xbf16, #tpu.memory_space<vmem>>, vector<32x96xbf16>
    %c32 = arith.constant 32 : index
    %c0_4 = arith.constant 0 : index
    %3 = vector.load %arg1[%c32, %c0_4] : memref<288x128xbf16, #tpu.memory_space<vmem>>, vector<32x32xbf16>
    %c64 = arith.constant 64 : index
    %c0_5 = arith.constant 0 : index
    %4 = vector.load %arg1[%c64, %c0_5] : memref<288x128xbf16, #tpu.memory_space<vmem>>, vector<32x32xbf16>
    %c96 = arith.constant 96 : index
    %c0_6 = arith.constant 0 : index
    %5 = vector.load %arg1[%c96, %c0_6] : memref<288x128xbf16, #tpu.memory_space<vmem>>, vector<32x32xbf16>
    %c0_7 = arith.constant 0 : index
    %c0_8 = arith.constant 0 : index
    %6 = vector.load %arg2[%c0_7, %c0_8] : memref<24x128xf32, #tpu.memory_space<vmem>>, vector<1x96xf32>
    %c1 = arith.constant 1 : index
    %c0_9 = arith.constant 0 : index
    %7 = vector.load %arg2[%c1, %c0_9] : memref<24x128xf32, #tpu.memory_space<vmem>>, vector<1x32xf32>
    %c1_10 = arith.constant 1 : index
    %c32_11 = arith.constant 32 : index
    %8 = vector.load %arg2[%c1_10, %c32_11] : memref<24x128xf32, #tpu.memory_space<vmem>>, vector<1x32xf32>
    %c1_12 = arith.constant 1 : index
    %c64_13 = arith.constant 64 : index
    %9 = vector.load %arg2[%c1_12, %c64_13] : memref<24x128xf32, #tpu.memory_space<vmem>>, vector<1x32xf32>
    %c2 = arith.constant 2 : index
    %c0_14 = arith.constant 0 : index
    %10 = vector.load %arg2[%c2, %c0_14] : memref<24x128xf32, #tpu.memory_space<vmem>>, vector<1x32xf32>
    %c2_15 = arith.constant 2 : index
    %c32_16 = arith.constant 32 : index
    %11 = vector.load %arg2[%c2_15, %c32_16] : memref<24x128xf32, #tpu.memory_space<vmem>>, vector<1x32xf32>
    %c2_17 = arith.constant 2 : index
    %c64_18 = arith.constant 64 : index
    %12 = vector.load %arg2[%c2_17, %c64_18] : memref<24x128xf32, #tpu.memory_space<vmem>>, vector<1x32xf32>
    %c2_19 = arith.constant 2 : index
    %c96_20 = arith.constant 96 : index
    %13 = vector.load %arg2[%c2_19, %c96_20] : memref<24x128xf32, #tpu.memory_space<vmem>>, vector<1x32xf32>
    %14 = arith.truncf %0 : vector<16x32xf32> to vector<16x32xbf16>
    %cst = arith.constant dense<0.000000e+00> : vector<16x96xf32>
    %15 = tpu.matmul %14, %2, %cst {dimension_numbers = #tpu.dot_dimension_numbers<[1], [0], [0], [1], [0, 0, 1, 1], [], []>} : vector<16x32xbf16>, vector<32x96xbf16>, vector<16x96xf32> -> vector<16x96xf32>
    %16 = vector.broadcast %6 : vector<1x96xf32> to vector<16x96xf32>
    %17 = arith.addf %15, %16 : vector<16x96xf32>
    %18 = vector.extract_strided_slice %17 {offsets = [0, 0], sizes = [16, 32], strides = [1, 1]} : vector<16x96xf32> to vector<16x32xf32>
    %19 = arith.truncf %18 : vector<16x32xf32> to vector<16x32xbf16>
    %20 = vector.extract_strided_slice %17 {offsets = [0, 64], sizes = [16, 32], strides = [1, 1]} : vector<16x96xf32> to vector<16x32xf32>
    %21 = arith.truncf %20 : vector<16x32xf32> to vector<16x32xbf16>
    %22 = vector.extract_strided_slice %17 {offsets = [0, 32], sizes = [16, 32], strides = [1, 1]} : vector<16x96xf32> to vector<16x32xf32>
    %23 = tpu.transpose %22, [1, 0] : vector<16x32xf32> -> vector<32x16xf32>
    %24 = arith.truncf %23 : vector<32x16xf32> to vector<32x16xbf16>
    %cst_21 = arith.constant 0.000000e+00 : f32
    %25 = vector.broadcast %cst_21 : f32 to vector<16x32xf32>
    %26 = vector.extract_strided_slice %19 {offsets = [0, 0], sizes = [16, 8], strides = [1, 1]} : vector<16x32xbf16> to vector<16x8xbf16>
    %27 = vector.extract_strided_slice %24 {offsets = [0, 0], sizes = [8, 16], strides = [1, 1]} : vector<32x16xbf16> to vector<8x16xbf16>
    %cst_22 = arith.constant dense<0.000000e+00> : vector<16x16xf32>
    %28 = tpu.matmul %26, %27, %cst_22 {dimension_numbers = #tpu.dot_dimension_numbers<[1], [0], [0], [1], [0, 0, 1, 1], [], []>} : vector<16x8xbf16>, vector<8x16xbf16>, vector<16x16xf32> -> vector<16x16xf32>
    %29 = arith.addf %28, %1 : vector<16x16xf32>
    %cst_23 = arith.constant dense<0xFF800000> : vector<16xf32>
    %30 = vector.multi_reduction <maximumf>, %29, %cst_23 [1] : vector<16x16xf32> to vector<16xf32>
    %31 = vector.shape_cast %30 : vector<16xf32> to vector<16x1xf32>
    %32 = vector.broadcast %31 : vector<16x1xf32> to vector<16x16xf32>
    %33 = arith.subf %29, %32 : vector<16x16xf32>
    %34 = math.exp %33 : vector<16x16xf32>
    %cst_24 = arith.constant dense<0.000000e+00> : vector<16xf32>
    %35 = vector.multi_reduction <add>, %34, %cst_24 [1] : vector<16x16xf32> to vector<16xf32>
    %36 = vector.shape_cast %35 : vector<16xf32> to vector<16x1xf32>
    %37 = tpu.reciprocal %36 {approx = true} : vector<16x1xf32> -> vector<16x1xf32>
    %38 = arith.truncf %34 : vector<16x16xf32> to vector<16x16xbf16>
    %39 = vector.extract_strided_slice %21 {offsets = [0, 0], sizes = [16, 8], strides = [1, 1]} : vector<16x32xbf16> to vector<16x8xbf16>
    %cst_25 = arith.constant dense<0.000000e+00> : vector<16x8xf32>
    %40 = tpu.matmul %38, %39, %cst_25 {dimension_numbers = #tpu.dot_dimension_numbers<[1], [0], [0], [1], [0, 0, 1, 1], [], []>} : vector<16x16xbf16>, vector<16x8xbf16>, vector<16x8xf32> -> vector<16x8xf32>
    %41 = vector.broadcast %37 : vector<16x1xf32> to vector<16x8xf32>
    %42 = arith.mulf %40, %41 : vector<16x8xf32>
    %43 = arith.truncf %42 : vector<16x8xf32> to vector<16x8xbf16>
    %44 = vector.extract_strided_slice %3 {offsets = [0, 0], sizes = [8, 32], strides = [1, 1]} : vector<32x32xbf16> to vector<8x32xbf16>
    %cst_26 = arith.constant dense<0.000000e+00> : vector<16x32xf32>
    %45 = tpu.matmul %43, %44, %cst_26 {dimension_numbers = #tpu.dot_dimension_numbers<[1], [0], [0], [1], [0, 0, 1, 1], [], []>} : vector<16x8xbf16>, vector<8x32xbf16>, vector<16x32xf32> -> vector<16x32xf32>
    %46 = arith.addf %25, %45 : vector<16x32xf32>
    %47 = vector.extract_strided_slice %19 {offsets = [0, 8], sizes = [16, 8], strides = [1, 1]} : vector<16x32xbf16> to vector<16x8xbf16>
    %48 = vector.extract_strided_slice %24 {offsets = [8, 0], sizes = [8, 16], strides = [1, 1]} : vector<32x16xbf16> to vector<8x16xbf16>
    %cst_27 = arith.constant dense<0.000000e+00> : vector<16x16xf32>
    %49 = tpu.matmul %47, %48, %cst_27 {dimension_numbers = #tpu.dot_dimension_numbers<[1], [0], [0], [1], [0, 0, 1, 1], [], []>} : vector<16x8xbf16>, vector<8x16xbf16>, vector<16x16xf32> -> vector<16x16xf32>
    %50 = arith.addf %49, %1 : vector<16x16xf32>
    %cst_28 = arith.constant dense<0xFF800000> : vector<16xf32>
    %51 = vector.multi_reduction <maximumf>, %50, %cst_28 [1] : vector<16x16xf32> to vector<16xf32>
    %52 = vector.shape_cast %51 : vector<16xf32> to vector<16x1xf32>
    %53 = vector.broadcast %52 : vector<16x1xf32> to vector<16x16xf32>
    %54 = arith.subf %50, %53 : vector<16x16xf32>
    %55 = math.exp %54 : vector<16x16xf32>
    %cst_29 = arith.constant dense<0.000000e+00> : vector<16xf32>
    %56 = vector.multi_reduction <add>, %55, %cst_29 [1] : vector<16x16xf32> to vector<16xf32>
    %57 = vector.shape_cast %56 : vector<16xf32> to vector<16x1xf32>
    %58 = tpu.reciprocal %57 {approx = true} : vector<16x1xf32> -> vector<16x1xf32>
    %59 = arith.truncf %55 : vector<16x16xf32> to vector<16x16xbf16>
    %60 = vector.extract_strided_slice %21 {offsets = [0, 8], sizes = [16, 8], strides = [1, 1]} : vector<16x32xbf16> to vector<16x8xbf16>
    %cst_30 = arith.constant dense<0.000000e+00> : vector<16x8xf32>
    %61 = tpu.matmul %59, %60, %cst_30 {dimension_numbers = #tpu.dot_dimension_numbers<[1], [0], [0], [1], [0, 0, 1, 1], [], []>} : vector<16x16xbf16>, vector<16x8xbf16>, vector<16x8xf32> -> vector<16x8xf32>
    %62 = vector.broadcast %58 : vector<16x1xf32> to vector<16x8xf32>
    %63 = arith.mulf %61, %62 : vector<16x8xf32>
    %64 = arith.truncf %63 : vector<16x8xf32> to vector<16x8xbf16>
    %65 = vector.extract_strided_slice %3 {offsets = [8, 0], sizes = [8, 32], strides = [1, 1]} : vector<32x32xbf16> to vector<8x32xbf16>
    %cst_31 = arith.constant dense<0.000000e+00> : vector<16x32xf32>
    %66 = tpu.matmul %64, %65, %cst_31 {dimension_numbers = #tpu.dot_dimension_numbers<[1], [0], [0], [1], [0, 0, 1, 1], [], []>} : vector<16x8xbf16>, vector<8x32xbf16>, vector<16x32xf32> -> vector<16x32xf32>
    %67 = arith.addf %46, %66 : vector<16x32xf32>
    %68 = vector.extract_strided_slice %19 {offsets = [0, 16], sizes = [16, 8], strides = [1, 1]} : vector<16x32xbf16> to vector<16x8xbf16>
    %69 = vector.extract_strided_slice %24 {offsets = [16, 0], sizes = [8, 16], strides = [1, 1]} : vector<32x16xbf16> to vector<8x16xbf16>
    %cst_32 = arith.constant dense<0.000000e+00> : vector<16x16xf32>
    %70 = tpu.matmul %68, %69, %cst_32 {dimension_numbers = #tpu.dot_dimension_numbers<[1], [0], [0], [1], [0, 0, 1, 1], [], []>} : vector<16x8xbf16>, vector<8x16xbf16>, vector<16x16xf32> -> vector<16x16xf32>
    %71 = arith.addf %70, %1 : vector<16x16xf32>
    %cst_33 = arith.constant dense<0xFF800000> : vector<16xf32>
    %72 = vector.multi_reduction <maximumf>, %71, %cst_33 [1] : vector<16x16xf32> to vector<16xf32>
    %73 = vector.shape_cast %72 : vector<16xf32> to vector<16x1xf32>
    %74 = vector.broadcast %73 : vector<16x1xf32> to vector<16x16xf32>
    %75 = arith.subf %71, %74 : vector<16x16xf32>
    %76 = math.exp %75 : vector<16x16xf32>
    %cst_34 = arith.constant dense<0.000000e+00> : vector<16xf32>
    %77 = vector.multi_reduction <add>, %76, %cst_34 [1] : vector<16x16xf32> to vector<16xf32>
    %78 = vector.shape_cast %77 : vector<16xf32> to vector<16x1xf32>
    %79 = tpu.reciprocal %78 {approx = true} : vector<16x1xf32> -> vector<16x1xf32>
    %80 = arith.truncf %76 : vector<16x16xf32> to vector<16x16xbf16>
    %81 = vector.extract_strided_slice %21 {offsets = [0, 16], sizes = [16, 8], strides = [1, 1]} : vector<16x32xbf16> to vector<16x8xbf16>
    %cst_35 = arith.constant dense<0.000000e+00> : vector<16x8xf32>
    %82 = tpu.matmul %80, %81, %cst_35 {dimension_numbers = #tpu.dot_dimension_numbers<[1], [0], [0], [1], [0, 0, 1, 1], [], []>} : vector<16x16xbf16>, vector<16x8xbf16>, vector<16x8xf32> -> vector<16x8xf32>
    %83 = vector.broadcast %79 : vector<16x1xf32> to vector<16x8xf32>
    %84 = arith.mulf %82, %83 : vector<16x8xf32>
    %85 = arith.truncf %84 : vector<16x8xf32> to vector<16x8xbf16>
    %86 = vector.extract_strided_slice %3 {offsets = [16, 0], sizes = [8, 32], strides = [1, 1]} : vector<32x32xbf16> to vector<8x32xbf16>
    %cst_36 = arith.constant dense<0.000000e+00> : vector<16x32xf32>
    %87 = tpu.matmul %85, %86, %cst_36 {dimension_numbers = #tpu.dot_dimension_numbers<[1], [0], [0], [1], [0, 0, 1, 1], [], []>} : vector<16x8xbf16>, vector<8x32xbf16>, vector<16x32xf32> -> vector<16x32xf32>
    %88 = arith.addf %67, %87 : vector<16x32xf32>
    %89 = vector.extract_strided_slice %19 {offsets = [0, 24], sizes = [16, 8], strides = [1, 1]} : vector<16x32xbf16> to vector<16x8xbf16>
    %90 = vector.extract_strided_slice %24 {offsets = [24, 0], sizes = [8, 16], strides = [1, 1]} : vector<32x16xbf16> to vector<8x16xbf16>
    %cst_37 = arith.constant dense<0.000000e+00> : vector<16x16xf32>
    %91 = tpu.matmul %89, %90, %cst_37 {dimension_numbers = #tpu.dot_dimension_numbers<[1], [0], [0], [1], [0, 0, 1, 1], [], []>} : vector<16x8xbf16>, vector<8x16xbf16>, vector<16x16xf32> -> vector<16x16xf32>
    %92 = arith.addf %91, %1 : vector<16x16xf32>
    %cst_38 = arith.constant dense<0xFF800000> : vector<16xf32>
    %93 = vector.multi_reduction <maximumf>, %92, %cst_38 [1] : vector<16x16xf32> to vector<16xf32>
    %94 = vector.shape_cast %93 : vector<16xf32> to vector<16x1xf32>
    %95 = vector.broadcast %94 : vector<16x1xf32> to vector<16x16xf32>
    %96 = arith.subf %92, %95 : vector<16x16xf32>
    %97 = math.exp %96 : vector<16x16xf32>
    %cst_39 = arith.constant dense<0.000000e+00> : vector<16xf32>
    %98 = vector.multi_reduction <add>, %97, %cst_39 [1] : vector<16x16xf32> to vector<16xf32>
    %99 = vector.shape_cast %98 : vector<16xf32> to vector<16x1xf32>
    %100 = tpu.reciprocal %99 {approx = true} : vector<16x1xf32> -> vector<16x1xf32>
    %101 = arith.truncf %97 : vector<16x16xf32> to vector<16x16xbf16>
    %102 = vector.extract_strided_slice %21 {offsets = [0, 24], sizes = [16, 8], strides = [1, 1]} : vector<16x32xbf16> to vector<16x8xbf16>
    %cst_40 = arith.constant dense<0.000000e+00> : vector<16x8xf32>
    %103 = tpu.matmul %101, %102, %cst_40 {dimension_numbers = #tpu.dot_dimension_numbers<[1], [0], [0], [1], [0, 0, 1, 1], [], []>} : vector<16x16xbf16>, vector<16x8xbf16>, vector<16x8xf32> -> vector<16x8xf32>
    %104 = vector.broadcast %100 : vector<16x1xf32> to vector<16x8xf32>
    %105 = arith.mulf %103, %104 : vector<16x8xf32>
    %106 = arith.truncf %105 : vector<16x8xf32> to vector<16x8xbf16>
    %107 = vector.extract_strided_slice %3 {offsets = [24, 0], sizes = [8, 32], strides = [1, 1]} : vector<32x32xbf16> to vector<8x32xbf16>
    %cst_41 = arith.constant dense<0.000000e+00> : vector<16x32xf32>
    %108 = tpu.matmul %106, %107, %cst_41 {dimension_numbers = #tpu.dot_dimension_numbers<[1], [0], [0], [1], [0, 0, 1, 1], [], []>} : vector<16x8xbf16>, vector<8x32xbf16>, vector<16x32xf32> -> vector<16x32xf32>
    %109 = arith.addf %88, %108 : vector<16x32xf32>
    %110 = vector.broadcast %7 : vector<1x32xf32> to vector<16x32xf32>
    %111 = arith.addf %109, %110 : vector<16x32xf32>
    %112 = arith.addf %0, %111 : vector<16x32xf32>
    %cst_42 = arith.constant dense<0.000000e+00> : vector<16xf32>
    %113 = vector.multi_reduction <add>, %112, %cst_42 [1] : vector<16x32xf32> to vector<16xf32>
    %114 = vector.shape_cast %113 : vector<16xf32> to vector<16x1xf32>
    %cst_43 = arith.constant 3.200000e+01 : f32
    %115 = vector.broadcast %cst_43 : f32 to vector<16x1xf32>
    %116 = arith.divf %114, %115 : vector<16x1xf32>
    %117 = vector.broadcast %116 : vector<16x1xf32> to vector<16x32xf32>
    %118 = arith.subf %112, %117 : vector<16x32xf32>
    %119 = arith.mulf %118, %118 : vector<16x32xf32>
    %cst_44 = arith.constant dense<0.000000e+00> : vector<16xf32>
    %120 = vector.multi_reduction <add>, %119, %cst_44 [1] : vector<16x32xf32> to vector<16xf32>
    %121 = vector.shape_cast %120 : vector<16xf32> to vector<16x1xf32>
    %cst_45 = arith.constant 3.200000e+01 : f32
    %122 = vector.broadcast %cst_45 : f32 to vector<16x1xf32>
    %123 = arith.divf %121, %122 : vector<16x1xf32>
    %124 = vector.broadcast %116 : vector<16x1xf32> to vector<16x32xf32>
    %125 = arith.subf %112, %124 : vector<16x32xf32>
    %cst_46 = arith.constant 9.99999974E-6 : f32
    %126 = vector.broadcast %cst_46 : f32 to vector<16x1xf32>
    %127 = arith.addf %123, %126 : vector<16x1xf32>
    %128 = math.rsqrt %127 : vector<16x1xf32>
    %129 = vector.broadcast %128 : vector<16x1xf32> to vector<16x32xf32>
    %130 = arith.mulf %125, %129 : vector<16x32xf32>
    %131 = vector.broadcast %10 : vector<1x32xf32> to vector<16x32xf32>
    %132 = arith.mulf %130, %131 : vector<16x32xf32>
    %133 = vector.broadcast %11 : vector<1x32xf32> to vector<16x32xf32>
    %134 = arith.addf %132, %133 : vector<16x32xf32>
    %135 = arith.truncf %134 : vector<16x32xf32> to vector<16x32xbf16>
    %cst_47 = arith.constant dense<0.000000e+00> : vector<16x32xf32>
    %136 = tpu.matmul %135, %4, %cst_47 {dimension_numbers = #tpu.dot_dimension_numbers<[1], [0], [0], [1], [0, 0, 1, 1], [], []>} : vector<16x32xbf16>, vector<32x32xbf16>, vector<16x32xf32> -> vector<16x32xf32>
    %137 = vector.broadcast %8 : vector<1x32xf32> to vector<16x32xf32>
    %138 = arith.addf %136, %137 : vector<16x32xf32>
    %cst_48 = arith.constant 0.000000e+00 : f32
    %139 = vector.broadcast %cst_48 : f32 to vector<16x32xf32>
    %140 = arith.maximumf %138, %139 : vector<16x32xf32>
    %141 = arith.truncf %140 : vector<16x32xf32> to vector<16x32xbf16>
    %cst_49 = arith.constant dense<0.000000e+00> : vector<16x32xf32>
    %142 = tpu.matmul %141, %5, %cst_49 {dimension_numbers = #tpu.dot_dimension_numbers<[1], [0], [0], [1], [0, 0, 1, 1], [], []>} : vector<16x32xbf16>, vector<32x32xbf16>, vector<16x32xf32> -> vector<16x32xf32>
    %143 = vector.broadcast %9 : vector<1x32xf32> to vector<16x32xf32>
    %144 = arith.addf %142, %143 : vector<16x32xf32>
    %145 = arith.addf %134, %144 : vector<16x32xf32>
    %cst_50 = arith.constant dense<0.000000e+00> : vector<16xf32>
    %146 = vector.multi_reduction <add>, %145, %cst_50 [1] : vector<16x32xf32> to vector<16xf32>
    %147 = vector.shape_cast %146 : vector<16xf32> to vector<16x1xf32>
    %cst_51 = arith.constant 3.200000e+01 : f32
    %148 = vector.broadcast %cst_51 : f32 to vector<16x1xf32>
    %149 = arith.divf %147, %148 : vector<16x1xf32>
    %150 = vector.broadcast %149 : vector<16x1xf32> to vector<16x32xf32>
    %151 = arith.subf %145, %150 : vector<16x32xf32>
    %152 = arith.mulf %151, %151 : vector<16x32xf32>
    %cst_52 = arith.constant dense<0.000000e+00> : vector<16xf32>
    %153 = vector.multi_reduction <add>, %152, %cst_52 [1] : vector<16x32xf32> to vector<16xf32>
    %154 = vector.shape_cast %153 : vector<16xf32> to vector<16x1xf32>
    %cst_53 = arith.constant 3.200000e+01 : f32
    %155 = vector.broadcast %cst_53 : f32 to vector<16x1xf32>
    %156 = arith.divf %154, %155 : vector<16x1xf32>
    %157 = vector.broadcast %149 : vector<16x1xf32> to vector<16x32xf32>
    %158 = arith.subf %145, %157 : vector<16x32xf32>
    %cst_54 = arith.constant 9.99999974E-6 : f32
    %159 = vector.broadcast %cst_54 : f32 to vector<16x1xf32>
    %160 = arith.addf %156, %159 : vector<16x1xf32>
    %161 = math.rsqrt %160 : vector<16x1xf32>
    %162 = vector.broadcast %161 : vector<16x1xf32> to vector<16x32xf32>
    %163 = arith.mulf %158, %162 : vector<16x32xf32>
    %164 = vector.broadcast %12 : vector<1x32xf32> to vector<16x32xf32>
    %165 = arith.mulf %163, %164 : vector<16x32xf32>
    %166 = vector.broadcast %13 : vector<1x32xf32> to vector<16x32xf32>
    %167 = arith.addf %165, %166 : vector<16x32xf32>
    %c128 = arith.constant 128 : index
    %c0_55 = arith.constant 0 : index
    %168 = vector.load %arg1[%c128, %c0_55] : memref<288x128xbf16, #tpu.memory_space<vmem>>, vector<32x96xbf16>
    %c160 = arith.constant 160 : index
    %c0_56 = arith.constant 0 : index
    %169 = vector.load %arg1[%c160, %c0_56] : memref<288x128xbf16, #tpu.memory_space<vmem>>, vector<32x32xbf16>
    %c192 = arith.constant 192 : index
    %c0_57 = arith.constant 0 : index
    %170 = vector.load %arg1[%c192, %c0_57] : memref<288x128xbf16, #tpu.memory_space<vmem>>, vector<32x32xbf16>
    %c224 = arith.constant 224 : index
    %c0_58 = arith.constant 0 : index
    %171 = vector.load %arg1[%c224, %c0_58] : memref<288x128xbf16, #tpu.memory_space<vmem>>, vector<32x32xbf16>
    %c3 = arith.constant 3 : index
    %c0_59 = arith.constant 0 : index
    %172 = vector.load %arg2[%c3, %c0_59] : memref<24x128xf32, #tpu.memory_space<vmem>>, vector<1x96xf32>
    %c4 = arith.constant 4 : index
    %c0_60 = arith.constant 0 : index
    %173 = vector.load %arg2[%c4, %c0_60] : memref<24x128xf32, #tpu.memory_space<vmem>>, vector<1x32xf32>
    %c4_61 = arith.constant 4 : index
    %c32_62 = arith.constant 32 : index
    %174 = vector.load %arg2[%c4_61, %c32_62] : memref<24x128xf32, #tpu.memory_space<vmem>>, vector<1x32xf32>
    %c4_63 = arith.constant 4 : index
    %c64_64 = arith.constant 64 : index
    %175 = vector.load %arg2[%c4_63, %c64_64] : memref<24x128xf32, #tpu.memory_space<vmem>>, vector<1x32xf32>
    %c5 = arith.constant 5 : index
    %c0_65 = arith.constant 0 : index
    %176 = vector.load %arg2[%c5, %c0_65] : memref<24x128xf32, #tpu.memory_space<vmem>>, vector<1x32xf32>
    %c5_66 = arith.constant 5 : index
    %c32_67 = arith.constant 32 : index
    %177 = vector.load %arg2[%c5_66, %c32_67] : memref<24x128xf32, #tpu.memory_space<vmem>>, vector<1x32xf32>
    %c5_68 = arith.constant 5 : index
    %c64_69 = arith.constant 64 : index
    %178 = vector.load %arg2[%c5_68, %c64_69] : memref<24x128xf32, #tpu.memory_space<vmem>>, vector<1x32xf32>
    %c5_70 = arith.constant 5 : index
    %c96_71 = arith.constant 96 : index
    %179 = vector.load %arg2[%c5_70, %c96_71] : memref<24x128xf32, #tpu.memory_space<vmem>>, vector<1x32xf32>
    %180 = arith.truncf %167 : vector<16x32xf32> to vector<16x32xbf16>
    %cst_72 = arith.constant dense<0.000000e+00> : vector<16x96xf32>
    %181 = tpu.matmul %180, %168, %cst_72 {dimension_numbers = #tpu.dot_dimension_numbers<[1], [0], [0], [1], [0, 0, 1, 1], [], []>} : vector<16x32xbf16>, vector<32x96xbf16>, vector<16x96xf32> -> vector<16x96xf32>
    %182 = vector.broadcast %172 : vector<1x96xf32> to vector<16x96xf32>
    %183 = arith.addf %181, %182 : vector<16x96xf32>
    %184 = vector.extract_strided_slice %183 {offsets = [0, 0], sizes = [16, 32], strides = [1, 1]} : vector<16x96xf32> to vector<16x32xf32>
    %185 = arith.truncf %184 : vector<16x32xf32> to vector<16x32xbf16>
    %186 = vector.extract_strided_slice %183 {offsets = [0, 64], sizes = [16, 32], strides = [1, 1]} : vector<16x96xf32> to vector<16x32xf32>
    %187 = arith.truncf %186 : vector<16x32xf32> to vector<16x32xbf16>
    %188 = vector.extract_strided_slice %183 {offsets = [0, 32], sizes = [16, 32], strides = [1, 1]} : vector<16x96xf32> to vector<16x32xf32>
    %189 = tpu.transpose %188, [1, 0] : vector<16x32xf32> -> vector<32x16xf32>
    %190 = arith.truncf %189 : vector<32x16xf32> to vector<32x16xbf16>
    %cst_73 = arith.constant 0.000000e+00 : f32
    %191 = vector.broadcast %cst_73 : f32 to vector<16x32xf32>
    %192 = vector.extract_strided_slice %185 {offsets = [0, 0], sizes = [16, 8], strides = [1, 1]} : vector<16x32xbf16> to vector<16x8xbf16>
    %193 = vector.extract_strided_slice %190 {offsets = [0, 0], sizes = [8, 16], strides = [1, 1]} : vector<32x16xbf16> to vector<8x16xbf16>
    %cst_74 = arith.constant dense<0.000000e+00> : vector<16x16xf32>
    %194 = tpu.matmul %192, %193, %cst_74 {dimension_numbers = #tpu.dot_dimension_numbers<[1], [0], [0], [1], [0, 0, 1, 1], [], []>} : vector<16x8xbf16>, vector<8x16xbf16>, vector<16x16xf32> -> vector<16x16xf32>
    %195 = arith.addf %194, %1 : vector<16x16xf32>
    %cst_75 = arith.constant dense<0xFF800000> : vector<16xf32>
    %196 = vector.multi_reduction <maximumf>, %195, %cst_75 [1] : vector<16x16xf32> to vector<16xf32>
    %197 = vector.shape_cast %196 : vector<16xf32> to vector<16x1xf32>
    %198 = vector.broadcast %197 : vector<16x1xf32> to vector<16x16xf32>
    %199 = arith.subf %195, %198 : vector<16x16xf32>
    %200 = math.exp %199 : vector<16x16xf32>
    %cst_76 = arith.constant dense<0.000000e+00> : vector<16xf32>
    %201 = vector.multi_reduction <add>, %200, %cst_76 [1] : vector<16x16xf32> to vector<16xf32>
    %202 = vector.shape_cast %201 : vector<16xf32> to vector<16x1xf32>
    %203 = tpu.reciprocal %202 {approx = true} : vector<16x1xf32> -> vector<16x1xf32>
    %204 = arith.truncf %200 : vector<16x16xf32> to vector<16x16xbf16>
    %205 = vector.extract_strided_slice %187 {offsets = [0, 0], sizes = [16, 8], strides = [1, 1]} : vector<16x32xbf16> to vector<16x8xbf16>
    %cst_77 = arith.constant dense<0.000000e+00> : vector<16x8xf32>
    %206 = tpu.matmul %204, %205, %cst_77 {dimension_numbers = #tpu.dot_dimension_numbers<[1], [0], [0], [1], [0, 0, 1, 1], [], []>} : vector<16x16xbf16>, vector<16x8xbf16>, vector<16x8xf32> -> vector<16x8xf32>
    %207 = vector.broadcast %203 : vector<16x1xf32> to vector<16x8xf32>
    %208 = arith.mulf %206, %207 : vector<16x8xf32>
    %209 = arith.truncf %208 : vector<16x8xf32> to vector<16x8xbf16>
    %210 = vector.extract_strided_slice %169 {offsets = [0, 0], sizes = [8, 32], strides = [1, 1]} : vector<32x32xbf16> to vector<8x32xbf16>
    %cst_78 = arith.constant dense<0.000000e+00> : vector<16x32xf32>
    %211 = tpu.matmul %209, %210, %cst_78 {dimension_numbers = #tpu.dot_dimension_numbers<[1], [0], [0], [1], [0, 0, 1, 1], [], []>} : vector<16x8xbf16>, vector<8x32xbf16>, vector<16x32xf32> -> vector<16x32xf32>
    %212 = arith.addf %191, %211 : vector<16x32xf32>
    %213 = vector.extract_strided_slice %185 {offsets = [0, 8], sizes = [16, 8], strides = [1, 1]} : vector<16x32xbf16> to vector<16x8xbf16>
    %214 = vector.extract_strided_slice %190 {offsets = [8, 0], sizes = [8, 16], strides = [1, 1]} : vector<32x16xbf16> to vector<8x16xbf16>
    %cst_79 = arith.constant dense<0.000000e+00> : vector<16x16xf32>
    %215 = tpu.matmul %213, %214, %cst_79 {dimension_numbers = #tpu.dot_dimension_numbers<[1], [0], [0], [1], [0, 0, 1, 1], [], []>} : vector<16x8xbf16>, vector<8x16xbf16>, vector<16x16xf32> -> vector<16x16xf32>
    %216 = arith.addf %215, %1 : vector<16x16xf32>
    %cst_80 = arith.constant dense<0xFF800000> : vector<16xf32>
    %217 = vector.multi_reduction <maximumf>, %216, %cst_80 [1] : vector<16x16xf32> to vector<16xf32>
    %218 = vector.shape_cast %217 : vector<16xf32> to vector<16x1xf32>
    %219 = vector.broadcast %218 : vector<16x1xf32> to vector<16x16xf32>
    %220 = arith.subf %216, %219 : vector<16x16xf32>
    %221 = math.exp %220 : vector<16x16xf32>
    %cst_81 = arith.constant dense<0.000000e+00> : vector<16xf32>
    %222 = vector.multi_reduction <add>, %221, %cst_81 [1] : vector<16x16xf32> to vector<16xf32>
    %223 = vector.shape_cast %222 : vector<16xf32> to vector<16x1xf32>
    %224 = tpu.reciprocal %223 {approx = true} : vector<16x1xf32> -> vector<16x1xf32>
    %225 = arith.truncf %221 : vector<16x16xf32> to vector<16x16xbf16>
    %226 = vector.extract_strided_slice %187 {offsets = [0, 8], sizes = [16, 8], strides = [1, 1]} : vector<16x32xbf16> to vector<16x8xbf16>
    %cst_82 = arith.constant dense<0.000000e+00> : vector<16x8xf32>
    %227 = tpu.matmul %225, %226, %cst_82 {dimension_numbers = #tpu.dot_dimension_numbers<[1], [0], [0], [1], [0, 0, 1, 1], [], []>} : vector<16x16xbf16>, vector<16x8xbf16>, vector<16x8xf32> -> vector<16x8xf32>
    %228 = vector.broadcast %224 : vector<16x1xf32> to vector<16x8xf32>
    %229 = arith.mulf %227, %228 : vector<16x8xf32>
    %230 = arith.truncf %229 : vector<16x8xf32> to vector<16x8xbf16>
    %231 = vector.extract_strided_slice %169 {offsets = [8, 0], sizes = [8, 32], strides = [1, 1]} : vector<32x32xbf16> to vector<8x32xbf16>
    %cst_83 = arith.constant dense<0.000000e+00> : vector<16x32xf32>
    %232 = tpu.matmul %230, %231, %cst_83 {dimension_numbers = #tpu.dot_dimension_numbers<[1], [0], [0], [1], [0, 0, 1, 1], [], []>} : vector<16x8xbf16>, vector<8x32xbf16>, vector<16x32xf32> -> vector<16x32xf32>
    %233 = arith.addf %212, %232 : vector<16x32xf32>
    %234 = vector.extract_strided_slice %185 {offsets = [0, 16], sizes = [16, 8], strides = [1, 1]} : vector<16x32xbf16> to vector<16x8xbf16>
    %235 = vector.extract_strided_slice %190 {offsets = [16, 0], sizes = [8, 16], strides = [1, 1]} : vector<32x16xbf16> to vector<8x16xbf16>
    %cst_84 = arith.constant dense<0.000000e+00> : vector<16x16xf32>
    %236 = tpu.matmul %234, %235, %cst_84 {dimension_numbers = #tpu.dot_dimension_numbers<[1], [0], [0], [1], [0, 0, 1, 1], [], []>} : vector<16x8xbf16>, vector<8x16xbf16>, vector<16x16xf32> -> vector<16x16xf32>
    %237 = arith.addf %236, %1 : vector<16x16xf32>
    %cst_85 = arith.constant dense<0xFF800000> : vector<16xf32>
    %238 = vector.multi_reduction <maximumf>, %237, %cst_85 [1] : vector<16x16xf32> to vector<16xf32>
    %239 = vector.shape_cast %238 : vector<16xf32> to vector<16x1xf32>
    %240 = vector.broadcast %239 : vector<16x1xf32> to vector<16x16xf32>
    %241 = arith.subf %237, %240 : vector<16x16xf32>
    %242 = math.exp %241 : vector<16x16xf32>
    %cst_86 = arith.constant dense<0.000000e+00> : vector<16xf32>
    %243 = vector.multi_reduction <add>, %242, %cst_86 [1] : vector<16x16xf32> to vector<16xf32>
    %244 = vector.shape_cast %243 : vector<16xf32> to vector<16x1xf32>
    %245 = tpu.reciprocal %244 {approx = true} : vector<16x1xf32> -> vector<16x1xf32>
    %246 = arith.truncf %242 : vector<16x16xf32> to vector<16x16xbf16>
    %247 = vector.extract_strided_slice %187 {offsets = [0, 16], sizes = [16, 8], strides = [1, 1]} : vector<16x32xbf16> to vector<16x8xbf16>
    %cst_87 = arith.constant dense<0.000000e+00> : vector<16x8xf32>
    %248 = tpu.matmul %246, %247, %cst_87 {dimension_numbers = #tpu.dot_dimension_numbers<[1], [0], [0], [1], [0, 0, 1, 1], [], []>} : vector<16x16xbf16>, vector<16x8xbf16>, vector<16x8xf32> -> vector<16x8xf32>
    %249 = vector.broadcast %245 : vector<16x1xf32> to vector<16x8xf32>
    %250 = arith.mulf %248, %249 : vector<16x8xf32>
    %251 = arith.truncf %250 : vector<16x8xf32> to vector<16x8xbf16>
    %252 = vector.extract_strided_slice %169 {offsets = [16, 0], sizes = [8, 32], strides = [1, 1]} : vector<32x32xbf16> to vector<8x32xbf16>
    %cst_88 = arith.constant dense<0.000000e+00> : vector<16x32xf32>
    %253 = tpu.matmul %251, %252, %cst_88 {dimension_numbers = #tpu.dot_dimension_numbers<[1], [0], [0], [1], [0, 0, 1, 1], [], []>} : vector<16x8xbf16>, vector<8x32xbf16>, vector<16x32xf32> -> vector<16x32xf32>
    %254 = arith.addf %233, %253 : vector<16x32xf32>
    %255 = vector.extract_strided_slice %185 {offsets = [0, 24], sizes = [16, 8], strides = [1, 1]} : vector<16x32xbf16> to vector<16x8xbf16>
    %256 = vector.extract_strided_slice %190 {offsets = [24, 0], sizes = [8, 16], strides = [1, 1]} : vector<32x16xbf16> to vector<8x16xbf16>
    %cst_89 = arith.constant dense<0.000000e+00> : vector<16x16xf32>
    %257 = tpu.matmul %255, %256, %cst_89 {dimension_numbers = #tpu.dot_dimension_numbers<[1], [0], [0], [1], [0, 0, 1, 1], [], []>} : vector<16x8xbf16>, vector<8x16xbf16>, vector<16x16xf32> -> vector<16x16xf32>
    %258 = arith.addf %257, %1 : vector<16x16xf32>
    %cst_90 = arith.constant dense<0xFF800000> : vector<16xf32>
    %259 = vector.multi_reduction <maximumf>, %258, %cst_90 [1] : vector<16x16xf32> to vector<16xf32>
    %260 = vector.shape_cast %259 : vector<16xf32> to vector<16x1xf32>
    %261 = vector.broadcast %260 : vector<16x1xf32> to vector<16x16xf32>
    %262 = arith.subf %258, %261 : vector<16x16xf32>
    %263 = math.exp %262 : vector<16x16xf32>
    %cst_91 = arith.constant dense<0.000000e+00> : vector<16xf32>
    %264 = vector.multi_reduction <add>, %263, %cst_91 [1] : vector<16x16xf32> to vector<16xf32>
    %265 = vector.shape_cast %264 : vector<16xf32> to vector<16x1xf32>
    %266 = tpu.reciprocal %265 {approx = true} : vector<16x1xf32> -> vector<16x1xf32>
    %267 = arith.truncf %263 : vector<16x16xf32> to vector<16x16xbf16>
    %268 = vector.extract_strided_slice %187 {offsets = [0, 24], sizes = [16, 8], strides = [1, 1]} : vector<16x32xbf16> to vector<16x8xbf16>
    %cst_92 = arith.constant dense<0.000000e+00> : vector<16x8xf32>
    %269 = tpu.matmul %267, %268, %cst_92 {dimension_numbers = #tpu.dot_dimension_numbers<[1], [0], [0], [1], [0, 0, 1, 1], [], []>} : vector<16x16xbf16>, vector<16x8xbf16>, vector<16x8xf32> -> vector<16x8xf32>
    %270 = vector.broadcast %266 : vector<16x1xf32> to vector<16x8xf32>
    %271 = arith.mulf %269, %270 : vector<16x8xf32>
    %272 = arith.truncf %271 : vector<16x8xf32> to vector<16x8xbf16>
    %273 = vector.extract_strided_slice %169 {offsets = [24, 0], sizes = [8, 32], strides = [1, 1]} : vector<32x32xbf16> to vector<8x32xbf16>
    %cst_93 = arith.constant dense<0.000000e+00> : vector<16x32xf32>
    %274 = tpu.matmul %272, %273, %cst_93 {dimension_numbers = #tpu.dot_dimension_numbers<[1], [0], [0], [1], [0, 0, 1, 1], [], []>} : vector<16x8xbf16>, vector<8x32xbf16>, vector<16x32xf32> -> vector<16x32xf32>
    %275 = arith.addf %254, %274 : vector<16x32xf32>
    %276 = vector.broadcast %173 : vector<1x32xf32> to vector<16x32xf32>
    %277 = arith.addf %275, %276 : vector<16x32xf32>
    %278 = arith.addf %167, %277 : vector<16x32xf32>
    %cst_94 = arith.constant dense<0.000000e+00> : vector<16xf32>
    %279 = vector.multi_reduction <add>, %278, %cst_94 [1] : vector<16x32xf32> to vector<16xf32>
    %280 = vector.shape_cast %279 : vector<16xf32> to vector<16x1xf32>
    %cst_95 = arith.constant 3.200000e+01 : f32
    %281 = vector.broadcast %cst_95 : f32 to vector<16x1xf32>
    %282 = arith.divf %280, %281 : vector<16x1xf32>
    %283 = vector.broadcast %282 : vector<16x1xf32> to vector<16x32xf32>
    %284 = arith.subf %278, %283 : vector<16x32xf32>
    %285 = arith.mulf %284, %284 : vector<16x32xf32>
    %cst_96 = arith.constant dense<0.000000e+00> : vector<16xf32>
    %286 = vector.multi_reduction <add>, %285, %cst_96 [1] : vector<16x32xf32> to vector<16xf32>
    %287 = vector.shape_cast %286 : vector<16xf32> to vector<16x1xf32>
    %cst_97 = arith.constant 3.200000e+01 : f32
    %288 = vector.broadcast %cst_97 : f32 to vector<16x1xf32>
    %289 = arith.divf %287, %288 : vector<16x1xf32>
    %290 = vector.broadcast %282 : vector<16x1xf32> to vector<16x32xf32>
    %291 = arith.subf %278, %290 : vector<16x32xf32>
    %cst_98 = arith.constant 9.99999974E-6 : f32
    %292 = vector.broadcast %cst_98 : f32 to vector<16x1xf32>
    %293 = arith.addf %289, %292 : vector<16x1xf32>
    %294 = math.rsqrt %293 : vector<16x1xf32>
    %295 = vector.broadcast %294 : vector<16x1xf32> to vector<16x32xf32>
    %296 = arith.mulf %291, %295 : vector<16x32xf32>
    %297 = vector.broadcast %176 : vector<1x32xf32> to vector<16x32xf32>
    %298 = arith.mulf %296, %297 : vector<16x32xf32>
    %299 = vector.broadcast %177 : vector<1x32xf32> to vector<16x32xf32>
    %300 = arith.addf %298, %299 : vector<16x32xf32>
    %301 = arith.truncf %300 : vector<16x32xf32> to vector<16x32xbf16>
    %cst_99 = arith.constant dense<0.000000e+00> : vector<16x32xf32>
    %302 = tpu.matmul %301, %170, %cst_99 {dimension_numbers = #tpu.dot_dimension_numbers<[1], [0], [0], [1], [0, 0, 1, 1], [], []>} : vector<16x32xbf16>, vector<32x32xbf16>, vector<16x32xf32> -> vector<16x32xf32>
    %303 = vector.broadcast %174 : vector<1x32xf32> to vector<16x32xf32>
    %304 = arith.addf %302, %303 : vector<16x32xf32>
    %cst_100 = arith.constant 0.000000e+00 : f32
    %305 = vector.broadcast %cst_100 : f32 to vector<16x32xf32>
    %306 = arith.maximumf %304, %305 : vector<16x32xf32>
    %307 = arith.truncf %306 : vector<16x32xf32> to vector<16x32xbf16>
    %cst_101 = arith.constant dense<0.000000e+00> : vector<16x32xf32>
    %308 = tpu.matmul %307, %171, %cst_101 {dimension_numbers = #tpu.dot_dimension_numbers<[1], [0], [0], [1], [0, 0, 1, 1], [], []>} : vector<16x32xbf16>, vector<32x32xbf16>, vector<16x32xf32> -> vector<16x32xf32>
    %309 = vector.broadcast %175 : vector<1x32xf32> to vector<16x32xf32>
    %310 = arith.addf %308, %309 : vector<16x32xf32>
    %311 = arith.addf %300, %310 : vector<16x32xf32>
    %cst_102 = arith.constant dense<0.000000e+00> : vector<16xf32>
    %312 = vector.multi_reduction <add>, %311, %cst_102 [1] : vector<16x32xf32> to vector<16xf32>
    %313 = vector.shape_cast %312 : vector<16xf32> to vector<16x1xf32>
    %cst_103 = arith.constant 3.200000e+01 : f32
    %314 = vector.broadcast %cst_103 : f32 to vector<16x1xf32>
    %315 = arith.divf %313, %314 : vector<16x1xf32>
    %316 = vector.broadcast %315 : vector<16x1xf32> to vector<16x32xf32>
    %317 = arith.subf %311, %316 : vector<16x32xf32>
    %318 = arith.mulf %317, %317 : vector<16x32xf32>
    %cst_104 = arith.constant dense<0.000000e+00> : vector<16xf32>
    %319 = vector.multi_reduction <add>, %318, %cst_104 [1] : vector<16x32xf32> to vector<16xf32>
    %320 = vector.shape_cast %319 : vector<16xf32> to vector<16x1xf32>
    %cst_105 = arith.constant 3.200000e+01 : f32
    %321 = vector.broadcast %cst_105 : f32 to vector<16x1xf32>
    %322 = arith.divf %320, %321 : vector<16x1xf32>
    %323 = vector.broadcast %315 : vector<16x1xf32> to vector<16x32xf32>
    %324 = arith.subf %311, %323 : vector<16x32xf32>
    %cst_106 = arith.constant 9.99999974E-6 : f32
    %325 = vector.broadcast %cst_106 : f32 to vector<16x1xf32>
    %326 = arith.addf %322, %325 : vector<16x1xf32>
    %327 = math.rsqrt %326 : vector<16x1xf32>
    %328 = vector.broadcast %327 : vector<16x1xf32> to vector<16x32xf32>
    %329 = arith.mulf %324, %328 : vector<16x32xf32>
    %330 = vector.broadcast %178 : vector<1x32xf32> to vector<16x32xf32>
    %331 = arith.mulf %329, %330 : vector<16x32xf32>
    %332 = vector.broadcast %179 : vector<1x32xf32> to vector<16x32xf32>
    %333 = arith.addf %331, %332 : vector<16x32xf32>
    %c256 = arith.constant 256 : index
    %c0_107 = arith.constant 0 : index
    %334 = vector.load %arg1[%c256, %c0_107] : memref<288x128xbf16, #tpu.memory_space<vmem>>, vector<32x128xbf16>
    %c6 = arith.constant 6 : index
    %c0_108 = arith.constant 0 : index
    %335 = vector.load %arg2[%c6, %c0_108] : memref<24x128xf32, #tpu.memory_space<vmem>>, vector<1x128xf32>
    %336 = arith.truncf %333 : vector<16x32xf32> to vector<16x32xbf16>
    %cst_109 = arith.constant dense<0.000000e+00> : vector<16x128xf32>
    %337 = tpu.matmul %336, %334, %cst_109 {dimension_numbers = #tpu.dot_dimension_numbers<[1], [0], [0], [1], [0, 0, 1, 1], [], []>} : vector<16x32xbf16>, vector<32x128xbf16>, vector<16x128xf32> -> vector<16x128xf32>
    %338 = vector.broadcast %335 : vector<1x128xf32> to vector<16x128xf32>
    %339 = arith.addf %337, %338 : vector<16x128xf32>
    %c0_110 = arith.constant 0 : index
    %c0_111 = arith.constant 0 : index
    %340 = vector.load %arg3[%c0_110, %c0_111] : memref<16x128xf32, #tpu.memory_space<vmem>>, vector<16x128xf32>
    tpu.vector_store %arg3[%c0_110, %c0_111], %339 {strides = array<i32>} : memref<16x128xf32, #tpu.memory_space<vmem>>, vector<16x128xf32>,
    return
  }
}

</mosaic_0001>

<llo_original>
// kernel: my_transformer_forward.1
$region0: #{my_transformer_forward.1}
  #allocation0 [shape = 'u32[]', space=smem, size = 0x4, offset = 0x4, fixed_abs, tag = 'smem constant byte address 0x4 - core index']
  #allocation1 [shape = 'u32[72,128]{1,0:T(1,128)}', space=vmem, size = 0x9000, scoped, tag = 'internal scratch']
  %s0 = inlined_call_operand.hbm [shape: f32[16,32], index: 0, kind: input, shape index: {}]
  %s1 = inlined_call_operand.hbm [shape: bf16[288,128], index: 1, kind: input, shape index: {}]
  %s2 = inlined_call_operand.hbm [shape: f32[24,128], index: 2, kind: input, shape index: {}]
  %s3 = inlined_call_operand.vmem [shape: f32[16,128], index: 3, kind: output, shape index: {}]
  %s4 = sld [smem:[#allocation0]]
  $region34: #{my_transformer_forward.1} parent=0
    _
  %s6 = ssub.s32 1, %s4
  %s7 = scalar_select 0, %s6, %s4
  $region1: #{my_transformer_forward.1} parent=0
    #allocation2 [shape = 'u8[8192]{0}', space=vmem, size = 0x2000, scoped, tag = 'input window, operand 0, single buffered']
    #allocation3 [shape = 's32[1]{0}', space=sflag, size = 0x4, scoped, tag = 'scoped memory for my_transformer_forward.1']
    #allocation4 [shape = 'u8[73728]{0}', space=vmem, size = 0x12000, scoped, tag = 'input window, operand 1, single buffered']
    #allocation5 [shape = 's32[1]{0}', space=sflag, size = 0x4, scoped, tag = 'scoped memory for my_transformer_forward.1']
    #allocation6 [shape = 'u8[12288]{0}', space=vmem, size = 0x3000, scoped, tag = 'input window, operand 2, single buffered']
    %8 = vsyncpa [#allocation3], 0
    %9 = vsyncpa [#allocation5], 0
    // Predicated region
    $region2: #{my_transformer_forward.1} parent=1 // pred_check
      _
    $region3: #{my_transformer_forward.1} parent=1 // pred_check_branch
      %11 = sbr.rel (0) target = $region5
    $region4: #{my_transformer_forward.1} parent=1 // pred_region
      %13 = vsyncadd [#allocation3], 0
      %s14 = sshll.u32 %s0, 4
      %s15 = int_to_ptr.hbm [resolvable:$true] %s14
      %s16 = sshll.u32 [#allocation2], 4
      %s17 = int_to_ptr.vmem [resolvable:$true] %s16
      %22 = dma.hbm_to_vmem [thread:$0]  %s15, 256, %s17, [#allocation3], 128, 128, 8
    $region5: #{my_transformer_forward.1} parent=1 // pred_fallthru
      _
    // Predicated region
    $region6: #{my_transformer_forward.1} parent=1 // pred_check
      _
    $region7: #{my_transformer_forward.1} parent=1 // pred_check_branch
      %24 = sbr.rel (0) target = $region9
    $region8: #{my_transformer_forward.1} parent=1 // pred_region
      %26 = vsyncadd [#allocation5], 0
      %s27 = sshll.u32 %s1, 4
      %s28 = int_to_ptr.hbm [resolvable:$true] %s27
      %s29 = sshll.u32 [#allocation4], 4
      %s30 = int_to_ptr.vmem [resolvable:$true] %s29
      %35 = dma.hbm_to_vmem [thread:$0]  %s28, 2304, %s30, [#allocation5], 64, 64, 4
    $region9: #{my_transformer_forward.1} parent=1 // pred_fallthru
      _
    // Predicated region
    $region10: #{my_transformer_forward.1} parent=1 // pred_check
      _
    $region11: #{my_transformer_forward.1} parent=1 // pred_check_branch
      %37 = sbr.rel (0) target = $region13
    $region12: #{my_transformer_forward.1} parent=1 // pred_region
      %39 = vsyncadd [#allocation5], 0
      %s40 = sshll.u32 %s2, 4
      %s41 = int_to_ptr.hbm [resolvable:$true] %s40
      %s42 = sshll.u32 [#allocation6], 4
      %s43 = int_to_ptr.vmem [resolvable:$true] %s42
      %48 = dma.hbm_to_vmem [thread:$0]  %s41, 384, %s43, [#allocation5], 128, 128, 8
    $region13: #{my_transformer_forward.1} parent=1 // pred_fallthru
      _
    // Predicated region
    $region14: #{my_transformer_forward.1} parent=1 // pred_check
      _
    $region15: #{my_transformer_forward.1} parent=1 // pred_check_branch
      %50 = sbr.rel (0) target = $region17
    $region16: #{my_transformer_forward.1} parent=1 // pred_region
      %52 = dma.done [#allocation3], 256
    $region17: #{my_transformer_forward.1} parent=1 // pred_fallthru
      _
    // Predicated region
    $region18: #{my_transformer_forward.1} parent=1 // pred_check
      _
    $region19: #{my_transformer_forward.1} parent=1 // pred_check_branch
      %54 = sbr.rel (0) target = $region21
    $region20: #{my_transformer_forward.1} parent=1 // pred_region
      %56 = dma.done [#allocation5], 2304
    $region21: #{my_transformer_forward.1} parent=1 // pred_fallthru
      _
    // Predicated region
    $region22: #{my_transformer_forward.1} parent=1 // pred_check
      _
    $region23: #{my_transformer_forward.1} parent=1 // pred_check_branch
      %58 = sbr.rel (0) target = $region25
    $region24: #{my_transformer_forward.1} parent=1 // pred_region
      %60 = dma.done [#allocation5], 384
    $region25: #{my_transformer_forward.1} parent=1 // pred_fallthru
      _
    %v62 = vld [vmem:[#allocation2] sm:$0xff]
    %v63 = vld [vmem:[#allocation2 + $0x8] sm:$0xff]
    %v64 = vld [vmem:[#allocation6 + $0x8] sm:$0xff]
    %v65 = vld [vmem:[#allocation6 + $0x10] sm:$0xff]
    %v66 = vld [vmem:[#allocation4] sm:$0xf]
    %v67 = vld [vmem:[#allocation4 + $0x4] sm:$0xf]
    %v68 = vld [vmem:[#allocation4 + $0x8] sm:$0xf]
    %v69 = vld [vmem:[#allocation4 + $0xc] sm:$0xf]
    %v70 = vld [vmem:[#allocation4 + $0x10] sm:$0xf]
    %v71 = vld [vmem:[#allocation4 + $0x14] sm:$0xf]
    %v72 = vld [vmem:[#allocation4 + $0x18] sm:$0xf]
    %v73 = vld [vmem:[#allocation4 + $0x1c] sm:$0xf]
    %v74 = vld [vmem:[#allocation4 + $0x20] sm:$0xf]
    %v75 = vld [vmem:[#allocation4 + $0x24] sm:$0xf]
    %v76 = vld [vmem:[#allocation4 + $0x28] sm:$0xf]
    %v77 = vld [vmem:[#allocation4 + $0x2c] sm:$0xf]
    %v78 = vld [vmem:[#allocation4 + $0x30] sm:$0xf]
    %v79 = vld [vmem:[#allocation4 + $0x34] sm:$0xf]
    %v80 = vld [vmem:[#allocation4 + $0x38] sm:$0xf]
    %v81 = vld [vmem:[#allocation4 + $0x3c] sm:$0xf]
    %v82 = vld [vmem:[#allocation6] sm:$0x1]
    %v83 = vld [vmem:[#allocation6 + $0x1] sm:$0x1]
    %v84 = vld [vmem:[#allocation6 + $0x2] sm:$0x1]
    %v85 = vpack.c.bf16 %v63, %v62
    %v86 = vperm.slane %v82, 0
    %v91 = vunpack.c.l.b16 %v66
    %v92 = vunpack.c.l.b16 %v67
    %v93 = vunpack.c.l.b16 %v68
    %v94 = vunpack.c.l.b16 %v69
    %v95 = vpack.c.b16 %v92, %v91
    %v96 = vpack.c.b16 %v94, %v93
    %vm99 = vcmask 261120
    %v101 = vsel %vm99, %v85, 0
    %103 = vmatpush.bf16.msra.mxu0 0
    %104 = vmatpush.bf16.msra.mxu0 0
    %105 = vmatpush.bf16.msra.mxu0 0
    %106 = vmatpush.bf16.msra.mxu0 0
    %107 = vmatpush.bf16.msra.mxu0 0
    %108 = vmatpush.bf16.msra.mxu0 0
    %109 = vmatpush.bf16.msra.mxu0 %v96
    %110 = vmatpush.bf16.msra.mxu0 %v95
    %111 = vmatmul.bf16.gmra.mxu0 %v101
    %v112 = vpop.f32.mrf.mxu0
    %v113 = vadd.f32 %v86, %v112
    %v114 = vpop.f32.mrf.mxu0
    %v115 = vadd.f32 %v86, %v114
    %116 = vdwg.mxu0
    %v117 = vpack.c.bf16 %v113, %v113
    %v118 = vpack.c.bf16 %v115, %v115
    %121 = vrot.lane.b32.xlu0 %v113, 96
    %v122 = vpop.permute.xlu0 %121
    %123 = vrot.lane.b32.xlu0 %v115, 96
    %v124 = vpop.permute.xlu0 %123
    %127 = vxpose.xlu0.b32.start [1/16] %v122, 128
    %128 = vxpose.xlu0.b32.cont [2/16] %v124, 128
    %129 = vxpose.xlu0.b32.cont [3/16] 0.0, 128
    %130 = vxpose.xlu0.b32.cont [4/16] 0.0, 128
    %131 = vxpose.xlu0.b32.cont [5/16] 0.0, 128
    %132 = vxpose.xlu0.b32.cont [6/16] 0.0, 128
    %133 = vxpose.xlu0.b32.cont [7/16] 0.0, 128
    %134 = vxpose.xlu0.b32.cont [8/16] 0.0, 128
    %135 = vxpose.xlu0.b32.cont [9/16] 0.0, 128
    %136 = vxpose.xlu0.b32.cont [10/16] 0.0, 128
    %137 = vxpose.xlu0.b32.cont [11/16] 0.0, 128
    %138 = vxpose.xlu0.b32.cont [12/16] 0.0, 128
    %139 = vxpose.xlu0.b32.cont [13/16] 0.0, 128
    %140 = vxpose.xlu0.b32.cont [14/16] 0.0, 128
    %141 = vxpose.xlu0.b32.cont [15/16] 0.0, 128
    %142 = vxpose.xlu0.b32.end [16/16] 0.0, 128
    %v143 = vpop.trf.xlu0
    %v144 = vpop.trf.xlu0
    %v145 = vpop.trf.xlu0
    %v146 = vpop.trf.xlu0
    %v147 = vpop.trf.xlu0
    %v148 = vpop.trf.xlu0
    %v149 = vpop.trf.xlu0
    %v150 = vpop.trf.xlu0
    %v151 = vpop.trf.xlu0
    %v152 = vpop.trf.xlu0
    %v153 = vpop.trf.xlu0
    %v154 = vpop.trf.xlu0
    %v155 = vpop.trf.xlu0
    %v156 = vpop.trf.xlu0
    %v157 = vpop.trf.xlu0
    %v158 = vpop.trf.xlu0
    %v159 = vpack.c.bf16 %v143, %v143
    %v160 = vpack.c.bf16 %v144, %v144
    %v161 = vpack.c.bf16 %v145, %v145
    %v162 = vpack.c.bf16 %v146, %v146
    %v165 = vunpack.c.l.b16 %v117
    %v166 = vunpack.c.l.b16 %v118
    %v167 = vpack.c.b16 %v166, %v165
    %vm168 = vcmask 64512
    %v170 = vsel %vm168, %v167, 0
    %vm172 = vcmask 1043456
    %v174 = vsel %vm172, %v159, 0
    %176 = vmatpush.bf16.msra.mxu0 0
    %177 = vmatpush.bf16.msra.mxu0 0
    %178 = vmatpush.bf16.msra.mxu0 0
    %179 = vmatpush.bf16.msra.mxu0 0
    %180 = vmatpush.bf16.msra.mxu0 0
    %181 = vmatpush.bf16.msra.mxu0 0
    %182 = vmatpush.bf16.msra.mxu0 0
    %183 = vmatpush.bf16.msra.mxu0 %v174
    %184 = vmatmul.bf16.gmra.mxu0 %v170
    %v185 = vpop.f32.mrf.mxu0
    %v186 = vadd.f32 %v64, %v185
    %v187 = vpop.f32.mrf.mxu0
    %v188 = vadd.f32 %v65, %v187
    %189 = vdwg.mxu0
    %vm190 = vcmask 130048
    %v191 = vsel %vm190, %v186, -inf
    %192 = vmax.xlane.f32.xlu0 %v191
    %v193 = vpop.xlane.xlu0 %192
    %v194 = vsel %vm190, %v188, -inf
    %195 = vmax.xlane.f32.xlu0 %v194
    %v196 = vpop.xlane.xlu0 %195
    %v197 = vsub.f32 %v186, %v193
    %v198 = vsub.f32 %v188, %v196
    %v199 = vmul.f32 %v197, 1.442695
    %v200 = vpow.pop %v199
    %v201 = vmul.f32 %v198, 1.442695
    %v202 = vpow.pop %v201
    %v203 = vsel %vm190, %v200, 0.0
    %204 = vadd.xlane.f32.xlu0 %v203
    %v205 = vpop.xlane.xlu0 %204
    %v206 = vsel %vm190, %v202, 0.0
    %207 = vadd.xlane.f32.xlu0 %v206
    %v208 = vpop.xlane.xlu0 %207
    %v209 = vrcp.pop %v205
    %v210 = vrcp.pop %v208
    %v211 = vpack.c.bf16 %v202, %v200
    %212 = vrot.lane.b32.xlu0 %v167, 64
    %v213 = vpop.permute.xlu0 %212
    %v216 = vsel %vm190, %v211, 0
    %218 = vmatpush.bf16.msra.mxu0 0
    %219 = vmatpush.bf16.msra.mxu0 0
    %220 = vmatpush.bf16.msra.mxu0 0
    %221 = vmatpush.bf16.msra.mxu0 0
    %222 = vmatpush.bf16.msra.mxu0 0
    %223 = vmatpush.bf16.msra.mxu0 0
    %224 = vmatpush.bf16.msra.mxu0 0
    %225 = vmatpush.bf16.msra.mxu0 %v213
    %226 = vmatmul.bf16.gmra.mxu0 %v216
    %v227 = vpop.f32.mrf.mxu0
    %v228 = vadd.f32 0.0, %v227
    %v229 = vpop.f32.mrf.mxu0
    %v230 = vadd.f32 0.0, %v229
    %231 = vdwg.mxu0
    %v232 = vmul.f32 %v228, %v209
    %v233 = vmul.f32 %v230, %v210
    %v234 = vpack.c.bf16 %v233, %v232
    %235 = vrot.lane.b32.xlu0 %v167, 120
    %v236 = vpop.permute.xlu0 %235
    %v238 = vsel %vm168, %v236, 0
    %v241 = vsel %vm172, %v160, 0
    %243 = vmatpush.bf16.msra.mxu0 0
    %244 = vmatpush.bf16.msra.mxu0 0
    %245 = vmatpush.bf16.msra.mxu0 0
    %246 = vmatpush.bf16.msra.mxu0 0
    %247 = vmatpush.bf16.msra.mxu0 0
    %248 = vmatpush.bf16.msra.mxu0 0
    %249 = vmatpush.bf16.msra.mxu0 0
    %250 = vmatpush.bf16.msra.mxu0 %v241
    %251 = vmatmul.bf16.gmra.mxu0 %v238
    %v252 = vpop.f32.mrf.mxu0
    %v253 = vadd.f32 %v64, %v252
    %v254 = vpop.f32.mrf.mxu0
    %v255 = vadd.f32 %v65, %v254
    %256 = vdwg.mxu0
    %v257 = vsel %vm190, %v253, -inf
    %258 = vmax.xlane.f32.xlu0 %v257
    %v259 = vpop.xlane.xlu0 %258
    %v260 = vsel %vm190, %v255, -inf
    %261 = vmax.xlane.f32.xlu0 %v260
    %v262 = vpop.xlane.xlu0 %261
    %v263 = vsub.f32 %v253, %v259
    %v264 = vsub.f32 %v255, %v262
    %v265 = vmul.f32 %v263, 1.442695
    %v266 = vpow.pop %v265
    %v267 = vmul.f32 %v264, 1.442695
    %v268 = vpow.pop %v267
    %v269 = vsel %vm190, %v266, 0.0
    %270 = vadd.xlane.f32.xlu0 %v269
    %v271 = vpop.xlane.xlu0 %270
    %v272 = vsel %vm190, %v268, 0.0
    %273 = vadd.xlane.f32.xlu0 %v272
    %v274 = vpop.xlane.xlu0 %273
    %v275 = vrcp.pop %v271
    %v276 = vrcp.pop %v274
    %v277 = vpack.c.bf16 %v268, %v266
    %278 = vrot.lane.b32.xlu0 %v167, 56
    %v279 = vpop.permute.xlu0 %278
    %v282 = vsel %vm190, %v277, 0
    %284 = vmatpush.bf16.msra.mxu0 0
    %285 = vmatpush.bf16.msra.mxu0 0
    %286 = vmatpush.bf16.msra.mxu0 0
    %287 = vmatpush.bf16.msra.mxu0 0
    %288 = vmatpush.bf16.msra.mxu0 0
    %289 = vmatpush.bf16.msra.mxu0 0
    %290 = vmatpush.bf16.msra.mxu0 0
    %291 = vmatpush.bf16.msra.mxu0 %v279
    %292 = vmatmul.bf16.gmra.mxu0 %v282
    %v293 = vpop.f32.mrf.mxu0
    %v294 = vadd.f32 0.0, %v293
    %v295 = vpop.f32.mrf.mxu0
    %v296 = vadd.f32 0.0, %v295
    %297 = vdwg.mxu0
    %v298 = vmul.f32 %v294, %v275
    %v299 = vmul.f32 %v296, %v276
    %v300 = vpack.c.bf16 %v299, %v298
    %v302 = vsel %vm168, %v300, 0
    %v305 = vsel %vm172, %v71, 0
    %307 = vmatpush.bf16.msra.mxu0 0
    %308 = vmatpush.bf16.msra.mxu0 0
    %309 = vmatpush.bf16.msra.mxu0 0
    %310 = vmatpush.bf16.msra.mxu0 0
    %311 = vmatpush.bf16.msra.mxu0 0
    %312 = vmatpush.bf16.msra.mxu0 0
    %313 = vmatpush.bf16.msra.mxu0 0
    %314 = vmatpush.bf16.msra.mxu0 %v305
    %315 = vmatmul.bf16.gmra.mxu0 %v302
    %v316 = vpop.f32.mrf.mxu0
    %v317 = vadd.f32 0.0, %v316
    %v318 = vpop.f32.mrf.mxu0
    %v319 = vadd.f32 0.0, %v318
    %320 = vdwg.mxu0
    %v322 = vsel %vm168, %v234, 0
    %v325 = vsel %vm172, %v70, 0
    %327 = vmatpush.bf16.msra.mxu0 0
    %328 = vmatpush.bf16.msra.mxu0 0
    %329 = vmatpush.bf16.msra.mxu0 0
    %330 = vmatpush.bf16.msra.mxu0 0
    %331 = vmatpush.bf16.msra.mxu0 0
    %332 = vmatpush.bf16.msra.mxu0 0
    %333 = vmatpush.bf16.msra.mxu0 0
    %334 = vmatpush.bf16.msra.mxu0 %v325
    %335 = vmatmul.bf16.gmra.mxu0 %v322
    %v336 = vpop.f32.mrf.mxu0
    %v337 = vadd.f32 %v317, %v336
    %v338 = vpop.f32.mrf.mxu0
    %v339 = vadd.f32 %v319, %v338
    %340 = vdwg.mxu0
    %341 = vrot.lane.b32.xlu0 %v167, 112
    %v342 = vpop.permute.xlu0 %341
    %v344 = vsel %vm168, %v342, 0
    %v347 = vsel %vm172, %v161, 0
    %349 = vmatpush.bf16.msra.mxu0 0
    %350 = vmatpush.bf16.msra.mxu0 0
    %351 = vmatpush.bf16.msra.mxu0 0
    %352 = vmatpush.bf16.msra.mxu0 0
    %353 = vmatpush.bf16.msra.mxu0 0
    %354 = vmatpush.bf16.msra.mxu0 0
    %355 = vmatpush.bf16.msra.mxu0 0
    %356 = vmatpush.bf16.msra.mxu0 %v347
    %357 = vmatmul.bf16.gmra.mxu0 %v344
    %v358 = vpop.f32.mrf.mxu0
    %v359 = vadd.f32 %v64, %v358
    %v360 = vpop.f32.mrf.mxu0
    %v361 = vadd.f32 %v65, %v360
    %362 = vdwg.mxu0
    %v363 = vsel %vm190, %v359, -inf
    %364 = vmax.xlane.f32.xlu0 %v363
    %v365 = vpop.xlane.xlu0 %364
    %v366 = vsel %vm190, %v361, -inf
    %367 = vmax.xlane.f32.xlu0 %v366
    %v368 = vpop.xlane.xlu0 %367
    %v369 = vsub.f32 %v359, %v365
    %v370 = vsub.f32 %v361, %v368
    %v371 = vmul.f32 %v369, 1.442695
    %v372 = vpow.pop %v371
    %v373 = vmul.f32 %v370, 1.442695
    %v374 = vpow.pop %v373
    %v375 = vsel %vm190, %v372, 0.0
    %376 = vadd.xlane.f32.xlu0 %v375
    %v377 = vpop.xlane.xlu0 %376
    %v378 = vsel %vm190, %v374, 0.0
    %379 = vadd.xlane.f32.xlu0 %v378
    %v380 = vpop.xlane.xlu0 %379
    %v381 = vrcp.pop %v377
    %v382 = vrcp.pop %v380
    %v383 = vpack.c.bf16 %v374, %v372
    %384 = vrot.lane.b32.xlu0 %v167, 48
    %v385 = vpop.permute.xlu0 %384
    %v388 = vsel %vm190, %v383, 0
    %390 = vmatpush.bf16.msra.mxu0 0
    %391 = vmatpush.bf16.msra.mxu0 0
    %392 = vmatpush.bf16.msra.mxu0 0
    %393 = vmatpush.bf16.msra.mxu0 0
    %394 = vmatpush.bf16.msra.mxu0 0
    %395 = vmatpush.bf16.msra.mxu0 0
    %396 = vmatpush.bf16.msra.mxu0 0
    %397 = vmatpush.bf16.msra.mxu0 %v385
    %398 = vmatmul.bf16.gmra.mxu0 %v388
    %v399 = vpop.f32.mrf.mxu0
    %v400 = vadd.f32 0.0, %v399
    %v401 = vpop.f32.mrf.mxu0
    %v402 = vadd.f32 0.0, %v401
    %403 = vdwg.mxu0
    %v404 = vmul.f32 %v400, %v381
    %v405 = vmul.f32 %v402, %v382
    %v406 = vpack.c.bf16 %v405, %v404
    %v408 = vsel %vm168, %v406, 0
    %v411 = vsel %vm172, %v72, 0
    %413 = vmatpush.bf16.msra.mxu0 0
    %414 = vmatpush.bf16.msra.mxu0 0
    %415 = vmatpush.bf16.msra.mxu0 0
    %416 = vmatpush.bf16.msra.mxu0 0
    %417 = vmatpush.bf16.msra.mxu0 0
    %418 = vmatpush.bf16.msra.mxu0 0
    %419 = vmatpush.bf16.msra.mxu0 0
    %420 = vmatpush.bf16.msra.mxu0 %v411
    %421 = vmatmul.bf16.gmra.mxu0 %v408
    %v422 = vpop.f32.mrf.mxu0
    %v423 = vadd.f32 0.0, %v422
    %v424 = vpop.f32.mrf.mxu0
    %v425 = vadd.f32 0.0, %v424
    %426 = vdwg.mxu0
    %v427 = vadd.f32 %v337, %v423
    %v428 = vadd.f32 %v339, %v425
    %429 = vrot.lane.b32.xlu0 %v167, 104
    %v430 = vpop.permute.xlu0 %429
    %v432 = vsel %vm168, %v430, 0
    %v435 = vsel %vm172, %v162, 0
    %437 = vmatpush.bf16.msra.mxu0 0
    %438 = vmatpush.bf16.msra.mxu0 0
    %439 = vmatpush.bf16.msra.mxu0 0
    %440 = vmatpush.bf16.msra.mxu0 0
    %441 = vmatpush.bf16.msra.mxu0 0
    %442 = vmatpush.bf16.msra.mxu0 0
    %443 = vmatpush.bf16.msra.mxu0 0
    %444 = vmatpush.bf16.msra.mxu0 %v435
    %445 = vmatmul.bf16.gmra.mxu0 %v432
    %v446 = vpop.f32.mrf.mxu0
    %v447 = vadd.f32 %v64, %v446
    %v448 = vpop.f32.mrf.mxu0
    %v449 = vadd.f32 %v65, %v448
    %450 = vdwg.mxu0
    %v451 = vsel %vm190, %v447, -inf
    %452 = vmax.xlane.f32.xlu0 %v451
    %v453 = vpop.xlane.xlu0 %452
    %v454 = vsel %vm190, %v449, -inf
    %455 = vmax.xlane.f32.xlu0 %v454
    %v456 = vpop.xlane.xlu0 %455
    %v457 = vsub.f32 %v447, %v453
    %v458 = vsub.f32 %v449, %v456
    %v459 = vmul.f32 %v457, 1.442695
    %v460 = vpow.pop %v459
    %v461 = vmul.f32 %v458, 1.442695
    %v462 = vpow.pop %v461
    %v463 = vsel %vm190, %v460, 0.0
    %464 = vadd.xlane.f32.xlu0 %v463
    %v465 = vpop.xlane.xlu0 %464
    %v466 = vsel %vm190, %v462, 0.0
    %467 = vadd.xlane.f32.xlu0 %v466
    %v468 = vpop.xlane.xlu0 %467
    %v469 = vrcp.pop %v465
    %v470 = vrcp.pop %v468
    %v471 = vpack.c.bf16 %v462, %v460
    %472 = vrot.lane.b32.xlu0 %v167, 40
    %v473 = vpop.permute.xlu0 %472
    %v476 = vsel %vm190, %v471, 0
    %478 = vmatpush.bf16.msra.mxu0 0
    %479 = vmatpush.bf16.msra.mxu0 0
    %480 = vmatpush.bf16.msra.mxu0 0
    %481 = vmatpush.bf16.msra.mxu0 0
    %482 = vmatpush.bf16.msra.mxu0 0
    %483 = vmatpush.bf16.msra.mxu0 0
    %484 = vmatpush.bf16.msra.mxu0 0
    %485 = vmatpush.bf16.msra.mxu0 %v473
    %486 = vmatmul.bf16.gmra.mxu0 %v476
    %v487 = vpop.f32.mrf.mxu0
    %v488 = vadd.f32 0.0, %v487
    %v489 = vpop.f32.mrf.mxu0
    %v490 = vadd.f32 0.0, %v489
    %491 = vdwg.mxu0
    %v492 = vmul.f32 %v488, %v469
    %v493 = vmul.f32 %v490, %v470
    %v494 = vpack.c.bf16 %v493, %v492
    %v496 = vsel %vm168, %v494, 0
    %v499 = vsel %vm172, %v73, 0
    %501 = vmatpush.bf16.msra.mxu0 0
    %502 = vmatpush.bf16.msra.mxu0 0
    %503 = vmatpush.bf16.msra.mxu0 0
    %504 = vmatpush.bf16.msra.mxu0 0
    %505 = vmatpush.bf16.msra.mxu0 0
    %506 = vmatpush.bf16.msra.mxu0 0
    %507 = vmatpush.bf16.msra.mxu0 0
    %508 = vmatpush.bf16.msra.mxu0 %v499
    %509 = vmatmul.bf16.gmra.mxu0 %v496
    %v510 = vpop.f32.mrf.mxu0
    %v511 = vadd.f32 0.0, %v510
    %v512 = vpop.f32.mrf.mxu0
    %v513 = vadd.f32 0.0, %v512
    %514 = vdwg.mxu0
    %v515 = vadd.f32 %v427, %v511
    %v516 = vadd.f32 %v428, %v513
    %v517 = vperm.slane %v83, 0
    %v518 = vadd.f32 %v515, %v517
    %v519 = vadd.f32 %v516, %v517
    %v520 = vadd.f32 %v62, %v518
    %v521 = vadd.f32 %v63, %v519
    %v522 = vsel %vm99, %v520, 0.0
    %523 = vadd.xlane.f32.xlu0 %v522
    %v524 = vpop.xlane.xlu0 %523
    %v525 = vsel %vm99, %v521, 0.0
    %526 = vadd.xlane.f32.xlu0 %v525
    %v527 = vpop.xlane.xlu0 %526
    %v528 = vrcp.pop 32.0
    %v529 = vmul.f32 32.0, %v528
    %v530 = vsub.f32 1.0, %v529
    %v531 = vmul.f32 %v528, %v530
    %v532 = vadd.f32 %v528, %v531
    %vm533 = vweird.f32 %v528
    %v534 = vsel %vm533, %v528, %v532
    %v535 = vmul.f32 %v524, %v534
    %v536 = vmul.f32 %v527, %v534
    %v537 = vsub.f32 %v520, %v535
    %v538 = vsub.f32 %v521, %v536
    %v539 = vmul.f32 %v537, %v537
    %v540 = vmul.f32 %v538, %v538
    %v541 = vsel %vm99, %v539, 0.0
    %542 = vadd.xlane.f32.xlu0 %v541
    %v543 = vpop.xlane.xlu0 %542
    %v544 = vsel %vm99, %v540, 0.0
    %545 = vadd.xlane.f32.xlu0 %v544
    %v546 = vpop.xlane.xlu0 %545
    %v547 = vmul.f32 %v543, %v534
    %v548 = vmul.f32 %v546, %v534
    %v549 = vadd.f32 %v547, 1e-05
    %v550 = vadd.f32 %v548, 1e-05
    %v551 = vrsqrt.pop %v549
    %v552 = vmul.f32 %v551, %v549
    %v553 = vmul.f32 %v552, %v551
    %v554 = vmul.f32 0.5, %v553
    %v555 = vsub.f32 1.5, %v554
    %v556 = vmul.f32 %v551, %v555
    %vm557 = vweird.f32 %v549
    %vm558 = vweird.f32 %v551
    %vm559 = vmor %vm557, %vm558
    %v560 = vsel %vm559, %v551, %v556
    %v561 = vrsqrt.pop %v550
    %v562 = vmul.f32 %v561, %v550
    %v563 = vmul.f32 %v562, %v561
    %v564 = vmul.f32 0.5, %v563
    %v565 = vsub.f32 1.5, %v564
    %v566 = vmul.f32 %v561, %v565
    %vm567 = vweird.f32 %v550
    %vm568 = vweird.f32 %v561
    %vm569 = vmor %vm567, %vm568
    %v570 = vsel %vm569, %v561, %v566
    %v571 = vmul.f32 %v537, %v560
    %v572 = vmul.f32 %v538, %v570
    %v573 = vperm.slane %v84, 0
    %v574 = vmul.f32 %v571, %v573
    %v575 = vmul.f32 %v572, %v573
    %577 = vrot.lane.b32.xlu0 %v573, 96
    %v578 = vpop.permute.xlu0 %577
    %v580 = vadd.f32 %v574, %v578
    %v581 = vadd.f32 %v575, %v578
    %v582 = vpack.c.bf16 %v581, %v580
    %v587 = vunpack.c.l.b16 %v74
    %v588 = vunpack.c.l.b16 %v75
    %v589 = vunpack.c.l.b16 %v76
    %v590 = vunpack.c.l.b16 %v77
    %v591 = vpack.c.b16 %v588, %v587
    %v592 = vpack.c.b16 %v590, %v589
    %596 = vrot.lane.b32.xlu0 %v517, 96
    %v597 = vpop.permute.xlu0 %596
    %v600 = vsel %vm99, %v582, 0
    %602 = vmatpush.bf16.msra.mxu0 0
    %603 = vmatpush.bf16.msra.mxu0 0
    %604 = vmatpush.bf16.msra.mxu0 0
    %605 = vmatpush.bf16.msra.mxu0 0
    %606 = vmatpush.bf16.msra.mxu0 0
    %607 = vmatpush.bf16.msra.mxu0 0
    %608 = vmatpush.bf16.msra.mxu0 %v592
    %609 = vmatpush.bf16.msra.mxu0 %v591
    %610 = vmatmul.bf16.gmra.mxu0 %v600
    %v611 = vpop.f32.mrf.mxu0
    %v612 = vadd.f32 %v597, %v611
    %v613 = vpop.f32.mrf.mxu0
    %v614 = vadd.f32 %v597, %v613
    %615 = vdwg.mxu0
    %v616 = vmax.f32 %v612, 0.0
    %v617 = vmax.f32 %v614, 0.0
    %v618 = vpack.c.bf16 %v617, %v616
    %v623 = vunpack.c.l.b16 %v78
    %v624 = vunpack.c.l.b16 %v79
    %v625 = vunpack.c.l.b16 %v80
    %v626 = vunpack.c.l.b16 %v81
    %v627 = vpack.c.b16 %v624, %v623
    %v628 = vpack.c.b16 %v626, %v625
    %631 = vrot.lane.b32.xlu0 %v517, 64
    %v632 = vpop.permute.xlu0 %631
    %v635 = vsel %vm99, %v618, 0
    %637 = vmatpush.bf16.msra.mxu0 0
    %638 = vmatpush.bf16.msra.mxu0 0
    %639 = vmatpush.bf16.msra.mxu0 0
    %640 = vmatpush.bf16.msra.mxu0 0
    %641 = vmatpush.bf16.msra.mxu0 0
    %642 = vmatpush.bf16.msra.mxu0 0
    %643 = vmatpush.bf16.msra.mxu0 %v628
    %644 = vmatpush.bf16.msra.mxu0 %v627
    %645 = vmatmul.bf16.gmra.mxu0 %v635
    %v646 = vpop.f32.mrf.mxu0
    %v647 = vadd.f32 %v632, %v646
    %v648 = vpop.f32.mrf.mxu0
    %v649 = vadd.f32 %v632, %v648
    %650 = vdwg.mxu0
    %v651 = vadd.f32 %v580, %v647
    %v652 = vadd.f32 %v581, %v649
    %v653 = vsel %vm99, %v651, 0.0
    %654 = vadd.xlane.f32.xlu0 %v653
    %v655 = vpop.xlane.xlu0 %654
    %v656 = vsel %vm99, %v652, 0.0
    %657 = vadd.xlane.f32.xlu0 %v656
    %v658 = vpop.xlane.xlu0 %657
    %v659 = vmul.f32 %v655, %v534
    %v660 = vmul.f32 %v658, %v534
    %v661 = vsub.f32 %v651, %v659
    %v662 = vsub.f32 %v652, %v660
    %v663 = vmul.f32 %v661, %v661
    %v664 = vmul.f32 %v662, %v662
    %v665 = vsel %vm99, %v663, 0.0
    %666 = vadd.xlane.f32.xlu0 %v665
    %v667 = vpop.xlane.xlu0 %666
    %v668 = vsel %vm99, %v664, 0.0
    %669 = vadd.xlane.f32.xlu0 %v668
    %v670 = vpop.xlane.xlu0 %669
    %v671 = vmul.f32 %v667, %v534
    %v672 = vmul.f32 %v670, %v534
    %v673 = vadd.f32 %v671, 1e-05
    %v674 = vadd.f32 %v672, 1e-05
    %v675 = vrsqrt.pop %v673
    %v676 = vmul.f32 %v675, %v673
    %v677 = vmul.f32 %v676, %v675
    %v678 = vmul.f32 0.5, %v677
    %v679 = vsub.f32 1.5, %v678
    %v680 = vmul.f32 %v675, %v679
    %vm681 = vweird.f32 %v673
    %vm682 = vweird.f32 %v675
    %vm683 = vmor %vm681, %vm682
    %v684 = vsel %vm683, %v675, %v680
    %v685 = vrsqrt.pop %v674
    %v686 = vmul.f32 %v685, %v674
    %v687 = vmul.f32 %v686, %v685
    %v688 = vmul.f32 0.5, %v687
    %v689 = vsub.f32 1.5, %v688
    %v690 = vmul.f32 %v685, %v689
    %vm691 = vweird.f32 %v674
    %vm692 = vweird.f32 %v685
    %vm693 = vmor %vm691, %vm692
    %v694 = vsel %vm693, %v685, %v690
    %v695 = vmul.f32 %v661, %v684
    %v696 = vmul.f32 %v662, %v694
    %697 = vrot.lane.b32.xlu0 %v573, 64
    %v698 = vpop.permute.xlu0 %697
    %v700 = vmul.f32 %v695, %v698
    %v701 = vmul.f32 %v696, %v698
    %702 = vrot.lane.b32.xlu0 %v573, 32
    %v703 = vpop.permute.xlu0 %702
    %v705 = vadd.f32 %v700, %v703
    %v706 = vadd.f32 %v701, %v703
    %v707 = vld [vmem:[#allocation4 + $0x40] sm:$0xf]
    %v708 = vld [vmem:[#allocation4 + $0x44] sm:$0xf]
    %v709 = vld [vmem:[#allocation4 + $0x48] sm:$0xf]
    %v710 = vld [vmem:[#allocation4 + $0x4c] sm:$0xf]
    %v711 = vld [vmem:[#allocation4 + $0x50] sm:$0xf]
    %v712 = vld [vmem:[#allocation4 + $0x54] sm:$0xf]
    %v713 = vld [vmem:[#allocation4 + $0x58] sm:$0xf]
    %v714 = vld [vmem:[#allocation4 + $0x5c] sm:$0xf]
    %v715 = vld [vmem:[#allocation4 + $0x60] sm:$0xf]
    %v716 = vld [vmem:[#allocation4 + $0x64] sm:$0xf]
    %v717 = vld [vmem:[#allocation4 + $0x68] sm:$0xf]
    %v718 = vld [vmem:[#allocation4 + $0x6c] sm:$0xf]
    %v719 = vld [vmem:[#allocation4 + $0x70] sm:$0xf]
    %v720 = vld [vmem:[#allocation4 + $0x74] sm:$0xf]
    %v721 = vld [vmem:[#allocation4 + $0x78] sm:$0xf]
    %v722 = vld [vmem:[#allocation4 + $0x7c] sm:$0xf]
    %v723 = vld [vmem:[#allocation6 + $0x3] sm:$0x1]
    %v724 = vld [vmem:[#allocation6 + $0x4] sm:$0x1]
    %v725 = vld [vmem:[#allocation6 + $0x5] sm:$0x1]
    %v726 = vpack.c.bf16 %v706, %v705
    %v727 = vperm.slane %v723, 0
    %v732 = vunpack.c.l.b16 %v707
    %v733 = vunpack.c.l.b16 %v708
    %v734 = vunpack.c.l.b16 %v709
    %v735 = vunpack.c.l.b16 %v710
    %v736 = vpack.c.b16 %v733, %v732
    %v737 = vpack.c.b16 %v735, %v734
    %v741 = vsel %vm99, %v726, 0
    %743 = vmatpush.bf16.msra.mxu0 0
    %744 = vmatpush.bf16.msra.mxu0 0
    %745 = vmatpush.bf16.msra.mxu0 0
    %746 = vmatpush.bf16.msra.mxu0 0
    %747 = vmatpush.bf16.msra.mxu0 0
    %748 = vmatpush.bf16.msra.mxu0 0
    %749 = vmatpush.bf16.msra.mxu0 %v737
    %750 = vmatpush.bf16.msra.mxu0 %v736
    %751 = vmatmul.bf16.gmra.mxu0 %v741
    %v752 = vpop.f32.mrf.mxu0
    %v753 = vadd.f32 %v727, %v752
    %v754 = vpop.f32.mrf.mxu0
    %v755 = vadd.f32 %v727, %v754
    %756 = vdwg.mxu0
    %v757 = vpack.c.bf16 %v753, %v753
    %v758 = vpack.c.bf16 %v755, %v755
    %761 = vrot.lane.b32.xlu0 %v753, 96
    %v762 = vpop.permute.xlu0 %761
    %763 = vrot.lane.b32.xlu0 %v755, 96
    %v764 = vpop.permute.xlu0 %763
    %767 = vxpose.xlu0.b32.start [1/16] %v762, 128
    %768 = vxpose.xlu0.b32.cont [2/16] %v764, 128
    %769 = vxpose.xlu0.b32.cont [3/16] 0.0, 128
    %770 = vxpose.xlu0.b32.cont [4/16] 0.0, 128
    %771 = vxpose.xlu0.b32.cont [5/16] 0.0, 128
    %772 = vxpose.xlu0.b32.cont [6/16] 0.0, 128
    %773 = vxpose.xlu0.b32.cont [7/16] 0.0, 128
    %774 = vxpose.xlu0.b32.cont [8/16] 0.0, 128
    %775 = vxpose.xlu0.b32.cont [9/16] 0.0, 128
    %776 = vxpose.xlu0.b32.cont [10/16] 0.0, 128
    %777 = vxpose.xlu0.b32.cont [11/16] 0.0, 128
    %778 = vxpose.xlu0.b32.cont [12/16] 0.0, 128
    %779 = vxpose.xlu0.b32.cont [13/16] 0.0, 128
    %780 = vxpose.xlu0.b32.cont [14/16] 0.0, 128
    %781 = vxpose.xlu0.b32.cont [15/16] 0.0, 128
    %782 = vxpose.xlu0.b32.end [16/16] 0.0, 128
    %v783 = vpop.trf.xlu0
    %v784 = vpop.trf.xlu0
    %v785 = vpop.trf.xlu0
    %v786 = vpop.trf.xlu0
    %v787 = vpop.trf.xlu0
    %v788 = vpop.trf.xlu0
    %v789 = vpop.trf.xlu0
    %v790 = vpop.trf.xlu0
    %v791 = vpop.trf.xlu0
    %v792 = vpop.trf.xlu0
    %v793 = vpop.trf.xlu0
    %v794 = vpop.trf.xlu0
    %v795 = vpop.trf.xlu0
    %v796 = vpop.trf.xlu0
    %v797 = vpop.trf.xlu0
    %v798 = vpop.trf.xlu0
    %v799 = vpack.c.bf16 %v783, %v783
    %v800 = vpack.c.bf16 %v784, %v784
    %v801 = vpack.c.bf16 %v785, %v785
    %v802 = vpack.c.bf16 %v786, %v786
    %v805 = vunpack.c.l.b16 %v757
    %v806 = vunpack.c.l.b16 %v758
    %v807 = vpack.c.b16 %v806, %v805
    %v809 = vsel %vm168, %v807, 0
    %v812 = vsel %vm172, %v799, 0
    %814 = vmatpush.bf16.msra.mxu0 0
    %815 = vmatpush.bf16.msra.mxu0 0
    %816 = vmatpush.bf16.msra.mxu0 0
    %817 = vmatpush.bf16.msra.mxu0 0
    %818 = vmatpush.bf16.msra.mxu0 0
    %819 = vmatpush.bf16.msra.mxu0 0
    %820 = vmatpush.bf16.msra.mxu0 0
    %821 = vmatpush.bf16.msra.mxu0 %v812
    %822 = vmatmul.bf16.gmra.mxu0 %v809
    %v823 = vpop.f32.mrf.mxu0
    %v824 = vadd.f32 %v64, %v823
    %v825 = vpop.f32.mrf.mxu0
    %v826 = vadd.f32 %v65, %v825
    %827 = vdwg.mxu0
    %v828 = vsel %vm190, %v824, -inf
    %829 = vmax.xlane.f32.xlu0 %v828
    %v830 = vpop.xlane.xlu0 %829
    %v831 = vsel %vm190, %v826, -inf
    %832 = vmax.xlane.f32.xlu0 %v831
    %v833 = vpop.xlane.xlu0 %832
    %v834 = vsub.f32 %v824, %v830
    %v835 = vsub.f32 %v826, %v833
    %v836 = vmul.f32 %v834, 1.442695
    %v837 = vpow.pop %v836
    %v838 = vmul.f32 %v835, 1.442695
    %v839 = vpow.pop %v838
    %v840 = vsel %vm190, %v837, 0.0
    %841 = vadd.xlane.f32.xlu0 %v840
    %v842 = vpop.xlane.xlu0 %841
    %v843 = vsel %vm190, %v839, 0.0
    %844 = vadd.xlane.f32.xlu0 %v843
    %v845 = vpop.xlane.xlu0 %844
    %v846 = vrcp.pop %v842
    %v847 = vrcp.pop %v845
    %v848 = vpack.c.bf16 %v839, %v837
    %849 = vrot.lane.b32.xlu0 %v807, 64
    %v850 = vpop.permute.xlu0 %849
    %v853 = vsel %vm190, %v848, 0
    %855 = vmatpush.bf16.msra.mxu0 0
    %856 = vmatpush.bf16.msra.mxu0 0
    %857 = vmatpush.bf16.msra.mxu0 0
    %858 = vmatpush.bf16.msra.mxu0 0
    %859 = vmatpush.bf16.msra.mxu0 0
    %860 = vmatpush.bf16.msra.mxu0 0
    %861 = vmatpush.bf16.msra.mxu0 0
    %862 = vmatpush.bf16.msra.mxu0 %v850
    %863 = vmatmul.bf16.gmra.mxu0 %v853
    %v864 = vpop.f32.mrf.mxu0
    %v865 = vadd.f32 0.0, %v864
    %v866 = vpop.f32.mrf.mxu0
    %v867 = vadd.f32 0.0, %v866
    %868 = vdwg.mxu0
    %v869 = vmul.f32 %v865, %v846
    %v870 = vmul.f32 %v867, %v847
    %v871 = vpack.c.bf16 %v870, %v869
    %872 = vrot.lane.b32.xlu0 %v807, 120
    %v873 = vpop.permute.xlu0 %872
    %v875 = vsel %vm168, %v873, 0
    %v878 = vsel %vm172, %v800, 0
    %880 = vmatpush.bf16.msra.mxu0 0
    %881 = vmatpush.bf16.msra.mxu0 0
    %882 = vmatpush.bf16.msra.mxu0 0
    %883 = vmatpush.bf16.msra.mxu0 0
    %884 = vmatpush.bf16.msra.mxu0 0
    %885 = vmatpush.bf16.msra.mxu0 0
    %886 = vmatpush.bf16.msra.mxu0 0
    %887 = vmatpush.bf16.msra.mxu0 %v878
    %888 = vmatmul.bf16.gmra.mxu0 %v875
    %v889 = vpop.f32.mrf.mxu0
    %v890 = vadd.f32 %v64, %v889
    %v891 = vpop.f32.mrf.mxu0
    %v892 = vadd.f32 %v65, %v891
    %893 = vdwg.mxu0
    %v894 = vsel %vm190, %v890, -inf
    %895 = vmax.xlane.f32.xlu0 %v894
    %v896 = vpop.xlane.xlu0 %895
    %v897 = vsel %vm190, %v892, -inf
    %898 = vmax.xlane.f32.xlu0 %v897
    %v899 = vpop.xlane.xlu0 %898
    %v900 = vsub.f32 %v890, %v896
    %v901 = vsub.f32 %v892, %v899
    %v902 = vmul.f32 %v900, 1.442695
    %v903 = vpow.pop %v902
    %v904 = vmul.f32 %v901, 1.442695
    %v905 = vpow.pop %v904
    %v906 = vsel %vm190, %v903, 0.0
    %907 = vadd.xlane.f32.xlu0 %v906
    %v908 = vpop.xlane.xlu0 %907
    %v909 = vsel %vm190, %v905, 0.0
    %910 = vadd.xlane.f32.xlu0 %v909
    %v911 = vpop.xlane.xlu0 %910
    %v912 = vrcp.pop %v908
    %v913 = vrcp.pop %v911
    %v914 = vpack.c.bf16 %v905, %v903
    %915 = vrot.lane.b32.xlu0 %v807, 56
    %v916 = vpop.permute.xlu0 %915
    %v919 = vsel %vm190, %v914, 0
    %921 = vmatpush.bf16.msra.mxu0 0
    %922 = vmatpush.bf16.msra.mxu0 0
    %923 = vmatpush.bf16.msra.mxu0 0
    %924 = vmatpush.bf16.msra.mxu0 0
    %925 = vmatpush.bf16.msra.mxu0 0
    %926 = vmatpush.bf16.msra.mxu0 0
    %927 = vmatpush.bf16.msra.mxu0 0
    %928 = vmatpush.bf16.msra.mxu0 %v916
    %929 = vmatmul.bf16.gmra.mxu0 %v919
    %v930 = vpop.f32.mrf.mxu0
    %v931 = vadd.f32 0.0, %v930
    %v932 = vpop.f32.mrf.mxu0
    %v933 = vadd.f32 0.0, %v932
    %934 = vdwg.mxu0
    %v935 = vmul.f32 %v931, %v912
    %v936 = vmul.f32 %v933, %v913
    %v937 = vpack.c.bf16 %v936, %v935
    %v939 = vsel %vm168, %v937, 0
    %v942 = vsel %vm172, %v712, 0
    %944 = vmatpush.bf16.msra.mxu0 0
    %945 = vmatpush.bf16.msra.mxu0 0
    %946 = vmatpush.bf16.msra.mxu0 0
    %947 = vmatpush.bf16.msra.mxu0 0
    %948 = vmatpush.bf16.msra.mxu0 0
    %949 = vmatpush.bf16.msra.mxu0 0
    %950 = vmatpush.bf16.msra.mxu0 0
    %951 = vmatpush.bf16.msra.mxu0 %v942
    %952 = vmatmul.bf16.gmra.mxu0 %v939
    %v953 = vpop.f32.mrf.mxu0
    %v954 = vadd.f32 0.0, %v953
    %v955 = vpop.f32.mrf.mxu0
    %v956 = vadd.f32 0.0, %v955
    %957 = vdwg.mxu0
    %v959 = vsel %vm168, %v871, 0
    %v962 = vsel %vm172, %v711, 0
    %964 = vmatpush.bf16.msra.mxu0 0
    %965 = vmatpush.bf16.msra.mxu0 0
    %966 = vmatpush.bf16.msra.mxu0 0
    %967 = vmatpush.bf16.msra.mxu0 0
    %968 = vmatpush.bf16.msra.mxu0 0
    %969 = vmatpush.bf16.msra.mxu0 0
    %970 = vmatpush.bf16.msra.mxu0 0
    %971 = vmatpush.bf16.msra.mxu0 %v962
    %972 = vmatmul.bf16.gmra.mxu0 %v959
    %v973 = vpop.f32.mrf.mxu0
    %v974 = vadd.f32 %v954, %v973
    %v975 = vpop.f32.mrf.mxu0
    %v976 = vadd.f32 %v956, %v975
    %977 = vdwg.mxu0
    %978 = vrot.lane.b32.xlu0 %v807, 112
    %v979 = vpop.permute.xlu0 %978
    %v981 = vsel %vm168, %v979, 0
    %v984 = vsel %vm172, %v801, 0
    %986 = vmatpush.bf16.msra.mxu0 0
    %987 = vmatpush.bf16.msra.mxu0 0
    %988 = vmatpush.bf16.msra.mxu0 0
    %989 = vmatpush.bf16.msra.mxu0 0
    %990 = vmatpush.bf16.msra.mxu0 0
    %991 = vmatpush.bf16.msra.mxu0 0
    %992 = vmatpush.bf16.msra.mxu0 0
    %993 = vmatpush.bf16.msra.mxu0 %v984
    %994 = vmatmul.bf16.gmra.mxu0 %v981
    %v995 = vpop.f32.mrf.mxu0
    %v996 = vadd.f32 %v64, %v995
    %v997 = vpop.f32.mrf.mxu0
    %v998 = vadd.f32 %v65, %v997
    %999 = vdwg.mxu0
    %v1000 = vsel %vm190, %v996, -inf
    %1001 = vmax.xlane.f32.xlu0 %v1000
    %v1002 = vpop.xlane.xlu0 %1001
    %v1003 = vsel %vm190, %v998, -inf
    %1004 = vmax.xlane.f32.xlu0 %v1003
    %v1005 = vpop.xlane.xlu0 %1004
    %v1006 = vsub.f32 %v996, %v1002
    %v1007 = vsub.f32 %v998, %v1005
    %v1008 = vmul.f32 %v1006, 1.442695
    %v1009 = vpow.pop %v1008
    %v1010 = vmul.f32 %v1007, 1.442695
    %v1011 = vpow.pop %v1010
    %v1012 = vsel %vm190, %v1009, 0.0
    %1013 = vadd.xlane.f32.xlu0 %v1012
    %v1014 = vpop.xlane.xlu0 %1013
    %v1015 = vsel %vm190, %v1011, 0.0
    %1016 = vadd.xlane.f32.xlu0 %v1015
    %v1017 = vpop.xlane.xlu0 %1016
    %v1018 = vrcp.pop %v1014
    %v1019 = vrcp.pop %v1017
    %v1020 = vpack.c.bf16 %v1011, %v1009
    %1021 = vrot.lane.b32.xlu0 %v807, 48
    %v1022 = vpop.permute.xlu0 %1021
    %v1025 = vsel %vm190, %v1020, 0
    %1027 = vmatpush.bf16.msra.mxu0 0
    %1028 = vmatpush.bf16.msra.mxu0 0
    %1029 = vmatpush.bf16.msra.mxu0 0
    %1030 = vmatpush.bf16.msra.mxu0 0
    %1031 = vmatpush.bf16.msra.mxu0 0
    %1032 = vmatpush.bf16.msra.mxu0 0
    %1033 = vmatpush.bf16.msra.mxu0 0
    %1034 = vmatpush.bf16.msra.mxu0 %v1022
    %1035 = vmatmul.bf16.gmra.mxu0 %v1025
    %v1036 = vpop.f32.mrf.mxu0
    %v1037 = vadd.f32 0.0, %v1036
    %v1038 = vpop.f32.mrf.mxu0
    %v1039 = vadd.f32 0.0, %v1038
    %1040 = vdwg.mxu0
    %v1041 = vmul.f32 %v1037, %v1018
    %v1042 = vmul.f32 %v1039, %v1019
    %v1043 = vpack.c.bf16 %v1042, %v1041
    %v1045 = vsel %vm168, %v1043, 0
    %v1048 = vsel %vm172, %v713, 0
    %1050 = vmatpush.bf16.msra.mxu0 0
    %1051 = vmatpush.bf16.msra.mxu0 0
    %1052 = vmatpush.bf16.msra.mxu0 0
    %1053 = vmatpush.bf16.msra.mxu0 0
    %1054 = vmatpush.bf16.msra.mxu0 0
    %1055 = vmatpush.bf16.msra.mxu0 0
    %1056 = vmatpush.bf16.msra.mxu0 0
    %1057 = vmatpush.bf16.msra.mxu0 %v1048
    %1058 = vmatmul.bf16.gmra.mxu0 %v1045
    %v1059 = vpop.f32.mrf.mxu0
    %v1060 = vadd.f32 0.0, %v1059
    %v1061 = vpop.f32.mrf.mxu0
    %v1062 = vadd.f32 0.0, %v1061
    %1063 = vdwg.mxu0
    %v1064 = vadd.f32 %v974, %v1060
    %v1065 = vadd.f32 %v976, %v1062
    %1066 = vrot.lane.b32.xlu0 %v807, 104
    %v1067 = vpop.permute.xlu0 %1066
    %v1069 = vsel %vm168, %v1067, 0
    %v1072 = vsel %vm172, %v802, 0
    %1074 = vmatpush.bf16.msra.mxu0 0
    %1075 = vmatpush.bf16.msra.mxu0 0
    %1076 = vmatpush.bf16.msra.mxu0 0
    %1077 = vmatpush.bf16.msra.mxu0 0
    %1078 = vmatpush.bf16.msra.mxu0 0
    %1079 = vmatpush.bf16.msra.mxu0 0
    %1080 = vmatpush.bf16.msra.mxu0 0
    %1081 = vmatpush.bf16.msra.mxu0 %v1072
    %1082 = vmatmul.bf16.gmra.mxu0 %v1069
    %v1083 = vpop.f32.mrf.mxu0
    %v1084 = vadd.f32 %v64, %v1083
    %v1085 = vpop.f32.mrf.mxu0
    %v1086 = vadd.f32 %v65, %v1085
    %1087 = vdwg.mxu0
    %v1088 = vsel %vm190, %v1084, -inf
    %1089 = vmax.xlane.f32.xlu0 %v1088
    %v1090 = vpop.xlane.xlu0 %1089
    %v1091 = vsel %vm190, %v1086, -inf
    %1092 = vmax.xlane.f32.xlu0 %v1091
    %v1093 = vpop.xlane.xlu0 %1092
    %v1094 = vsub.f32 %v1084, %v1090
    %v1095 = vsub.f32 %v1086, %v1093
    %v1096 = vmul.f32 %v1094, 1.442695
    %v1097 = vpow.pop %v1096
    %v1098 = vmul.f32 %v1095, 1.442695
    %v1099 = vpow.pop %v1098
    %v1100 = vsel %vm190, %v1097, 0.0
    %1101 = vadd.xlane.f32.xlu0 %v1100
    %v1102 = vpop.xlane.xlu0 %1101
    %v1103 = vsel %vm190, %v1099, 0.0
    %1104 = vadd.xlane.f32.xlu0 %v1103
    %v1105 = vpop.xlane.xlu0 %1104
    %v1106 = vrcp.pop %v1102
    %v1107 = vrcp.pop %v1105
    %v1108 = vpack.c.bf16 %v1099, %v1097
    %1109 = vrot.lane.b32.xlu0 %v807, 40
    %v1110 = vpop.permute.xlu0 %1109
    %v1113 = vsel %vm190, %v1108, 0
    %1115 = vmatpush.bf16.msra.mxu0 0
    %1116 = vmatpush.bf16.msra.mxu0 0
    %1117 = vmatpush.bf16.msra.mxu0 0
    %1118 = vmatpush.bf16.msra.mxu0 0
    %1119 = vmatpush.bf16.msra.mxu0 0
    %1120 = vmatpush.bf16.msra.mxu0 0
    %1121 = vmatpush.bf16.msra.mxu0 0
    %1122 = vmatpush.bf16.msra.mxu0 %v1110
    %1123 = vmatmul.bf16.gmra.mxu0 %v1113
    %v1124 = vpop.f32.mrf.mxu0
    %v1125 = vadd.f32 0.0, %v1124
    %v1126 = vpop.f32.mrf.mxu0
    %v1127 = vadd.f32 0.0, %v1126
    %1128 = vdwg.mxu0
    %v1129 = vmul.f32 %v1125, %v1106
    %v1130 = vmul.f32 %v1127, %v1107
    %v1131 = vpack.c.bf16 %v1130, %v1129
    %v1133 = vsel %vm168, %v1131, 0
    %v1136 = vsel %vm172, %v714, 0
    %1138 = vmatpush.bf16.msra.mxu0 0
    %1139 = vmatpush.bf16.msra.mxu0 0
    %1140 = vmatpush.bf16.msra.mxu0 0
    %1141 = vmatpush.bf16.msra.mxu0 0
    %1142 = vmatpush.bf16.msra.mxu0 0
    %1143 = vmatpush.bf16.msra.mxu0 0
    %1144 = vmatpush.bf16.msra.mxu0 0
    %1145 = vmatpush.bf16.msra.mxu0 %v1136
    %1146 = vmatmul.bf16.gmra.mxu0 %v1133
    %v1147 = vpop.f32.mrf.mxu0
    %v1148 = vadd.f32 0.0, %v1147
    %v1149 = vpop.f32.mrf.mxu0
    %v1150 = vadd.f32 0.0, %v1149
    %1151 = vdwg.mxu0
    %v1152 = vadd.f32 %v1064, %v1148
    %v1153 = vadd.f32 %v1065, %v1150
    %v1154 = vperm.slane %v724, 0
    %v1155 = vadd.f32 %v1152, %v1154
    %v1156 = vadd.f32 %v1153, %v1154
    %v1157 = vadd.f32 %v705, %v1155
    %v1158 = vadd.f32 %v706, %v1156
    %v1159 = vsel %vm99, %v1157, 0.0
    %1160 = vadd.xlane.f32.xlu0 %v1159
    %v1161 = vpop.xlane.xlu0 %1160
    %v1162 = vsel %vm99, %v1158, 0.0
    %1163 = vadd.xlane.f32.xlu0 %v1162
    %v1164 = vpop.xlane.xlu0 %1163
    %v1165 = vmul.f32 %v1161, %v534
    %v1166 = vmul.f32 %v1164, %v534
    %v1167 = vsub.f32 %v1157, %v1165
    %v1168 = vsub.f32 %v1158, %v1166
    %v1169 = vmul.f32 %v1167, %v1167
    %v1170 = vmul.f32 %v1168, %v1168
    %v1171 = vsel %vm99, %v1169, 0.0
    %1172 = vadd.xlane.f32.xlu0 %v1171
    %v1173 = vpop.xlane.xlu0 %1172
    %v1174 = vsel %vm99, %v1170, 0.0
    %1175 = vadd.xlane.f32.xlu0 %v1174
    %v1176 = vpop.xlane.xlu0 %1175
    %v1177 = vmul.f32 %v1173, %v534
    %v1178 = vmul.f32 %v1176, %v534
    %v1179 = vadd.f32 %v1177, 1e-05
    %v1180 = vadd.f32 %v1178, 1e-05
    %v1181 = vrsqrt.pop %v1179
    %v1182 = vmul.f32 %v1181, %v1179
    %v1183 = vmul.f32 %v1182, %v1181
    %v1184 = vmul.f32 0.5, %v1183
    %v1185 = vsub.f32 1.5, %v1184
    %v1186 = vmul.f32 %v1181, %v1185
    %vm1187 = vweird.f32 %v1179
    %vm1188 = vweird.f32 %v1181
    %vm1189 = vmor %vm1187, %vm1188
    %v1190 = vsel %vm1189, %v1181, %v1186
    %v1191 = vrsqrt.pop %v1180
    %v1192 = vmul.f32 %v1191, %v1180
    %v1193 = vmul.f32 %v1192, %v1191
    %v1194 = vmul.f32 0.5, %v1193
    %v1195 = vsub.f32 1.5, %v1194
    %v1196 = vmul.f32 %v1191, %v1195
    %vm1197 = vweird.f32 %v1180
    %vm1198 = vweird.f32 %v1191
    %vm1199 = vmor %vm1197, %vm1198
    %v1200 = vsel %vm1199, %v1191, %v1196
    %v1201 = vmul.f32 %v1167, %v1190
    %v1202 = vmul.f32 %v1168, %v1200
    %v1203 = vperm.slane %v725, 0
    %v1204 = vmul.f32 %v1201, %v1203
    %v1205 = vmul.f32 %v1202, %v1203
    %1207 = vrot.lane.b32.xlu0 %v1203, 96
    %v1208 = vpop.permute.xlu0 %1207
    %v1210 = vadd.f32 %v1204, %v1208
    %v1211 = vadd.f32 %v1205, %v1208
    %v1212 = vpack.c.bf16 %v1211, %v1210
    %v1217 = vunpack.c.l.b16 %v715
    %v1218 = vunpack.c.l.b16 %v716
    %v1219 = vunpack.c.l.b16 %v717
    %v1220 = vunpack.c.l.b16 %v718
    %v1221 = vpack.c.b16 %v1218, %v1217
    %v1222 = vpack.c.b16 %v1220, %v1219
    %1226 = vrot.lane.b32.xlu0 %v1154, 96
    %v1227 = vpop.permute.xlu0 %1226
    %v1230 = vsel %vm99, %v1212, 0
    %1232 = vmatpush.bf16.msra.mxu0 0
    %1233 = vmatpush.bf16.msra.mxu0 0
    %1234 = vmatpush.bf16.msra.mxu0 0
    %1235 = vmatpush.bf16.msra.mxu0 0
    %1236 = vmatpush.bf16.msra.mxu0 0
    %1237 = vmatpush.bf16.msra.mxu0 0
    %1238 = vmatpush.bf16.msra.mxu0 %v1222
    %1239 = vmatpush.bf16.msra.mxu0 %v1221
    %1240 = vmatmul.bf16.gmra.mxu0 %v1230
    %v1241 = vpop.f32.mrf.mxu0
    %v1242 = vadd.f32 %v1227, %v1241
    %v1243 = vpop.f32.mrf.mxu0
    %v1244 = vadd.f32 %v1227, %v1243
    %1245 = vdwg.mxu0
    %v1246 = vmax.f32 %v1242, 0.0
    %v1247 = vmax.f32 %v1244, 0.0
    %v1248 = vpack.c.bf16 %v1247, %v1246
    %v1253 = vunpack.c.l.b16 %v719
    %v1254 = vunpack.c.l.b16 %v720
    %v1255 = vunpack.c.l.b16 %v721
    %v1256 = vunpack.c.l.b16 %v722
    %v1257 = vpack.c.b16 %v1254, %v1253
    %v1258 = vpack.c.b16 %v1256, %v1255
    %1261 = vrot.lane.b32.xlu0 %v1154, 64
    %v1262 = vpop.permute.xlu0 %1261
    %v1265 = vsel %vm99, %v1248, 0
    %1267 = vmatpush.bf16.msra.mxu0 0
    %1268 = vmatpush.bf16.msra.mxu0 0
    %1269 = vmatpush.bf16.msra.mxu0 0
    %1270 = vmatpush.bf16.msra.mxu0 0
    %1271 = vmatpush.bf16.msra.mxu0 0
    %1272 = vmatpush.bf16.msra.mxu0 0
    %1273 = vmatpush.bf16.msra.mxu0 %v1258
    %1274 = vmatpush.bf16.msra.mxu0 %v1257
    %1275 = vmatmul.bf16.gmra.mxu0 %v1265
    %v1276 = vpop.f32.mrf.mxu0
    %v1277 = vadd.f32 %v1262, %v1276
    %v1278 = vpop.f32.mrf.mxu0
    %v1279 = vadd.f32 %v1262, %v1278
    %1280 = vdwg.mxu0
    %v1281 = vadd.f32 %v1210, %v1277
    %v1282 = vadd.f32 %v1211, %v1279
    %v1283 = vsel %vm99, %v1281, 0.0
    %1284 = vadd.xlane.f32.xlu0 %v1283
    %v1285 = vpop.xlane.xlu0 %1284
    %v1286 = vsel %vm99, %v1282, 0.0
    %1287 = vadd.xlane.f32.xlu0 %v1286
    %v1288 = vpop.xlane.xlu0 %1287
    %v1289 = vmul.f32 %v1285, %v534
    %v1290 = vmul.f32 %v1288, %v534
    %v1291 = vsub.f32 %v1281, %v1289
    %v1292 = vsub.f32 %v1282, %v1290
    %v1293 = vmul.f32 %v1291, %v1291
    %v1294 = vmul.f32 %v1292, %v1292
    %v1295 = vsel %vm99, %v1293, 0.0
    %1296 = vadd.xlane.f32.xlu0 %v1295
    %v1297 = vpop.xlane.xlu0 %1296
    %v1298 = vsel %vm99, %v1294, 0.0
    %1299 = vadd.xlane.f32.xlu0 %v1298
    %v1300 = vpop.xlane.xlu0 %1299
    %v1301 = vmul.f32 %v1297, %v534
    %v1302 = vmul.f32 %v1300, %v534
    %v1303 = vadd.f32 %v1301, 1e-05
    %v1304 = vadd.f32 %v1302, 1e-05
    %v1305 = vrsqrt.pop %v1303
    %v1306 = vmul.f32 %v1305, %v1303
    %v1307 = vmul.f32 %v1306, %v1305
    %v1308 = vmul.f32 0.5, %v1307
    %v1309 = vsub.f32 1.5, %v1308
    %v1310 = vmul.f32 %v1305, %v1309
    %vm1311 = vweird.f32 %v1303
    %vm1312 = vweird.f32 %v1305
    %vm1313 = vmor %vm1311, %vm1312
    %v1314 = vsel %vm1313, %v1305, %v1310
    %v1315 = vrsqrt.pop %v1304
    %v1316 = vmul.f32 %v1315, %v1304
    %v1317 = vmul.f32 %v1316, %v1315
    %v1318 = vmul.f32 0.5, %v1317
    %v1319 = vsub.f32 1.5, %v1318
    %v1320 = vmul.f32 %v1315, %v1319
    %vm1321 = vweird.f32 %v1304
    %vm1322 = vweird.f32 %v1315
    %vm1323 = vmor %vm1321, %vm1322
    %v1324 = vsel %vm1323, %v1315, %v1320
    %v1325 = vmul.f32 %v1291, %v1314
    %v1326 = vmul.f32 %v1292, %v1324
    %1327 = vrot.lane.b32.xlu0 %v1203, 64
    %v1328 = vpop.permute.xlu0 %1327
    %v1330 = vmul.f32 %v1325, %v1328
    %v1331 = vmul.f32 %v1326, %v1328
    %1332 = vrot.lane.b32.xlu0 %v1203, 32
    %v1333 = vpop.permute.xlu0 %1332
    %v1335 = vadd.f32 %v1330, %v1333
    %v1336 = vadd.f32 %v1331, %v1333
    %v1337 = vld [vmem:[#allocation4 + $0x80] sm:$0xf]
    %v1338 = vld [vmem:[#allocation4 + $0x84] sm:$0xf]
    %v1339 = vld [vmem:[#allocation4 + $0x88] sm:$0xf]
    %v1340 = vld [vmem:[#allocation4 + $0x8c] sm:$0xf]
    %v1341 = vld [vmem:[#allocation6 + $0x6] sm:$0x1]
    %v1342 = vpack.c.bf16 %v1336, %v1335
    %v1343 = vperm.slane %v1341, 0
    %v1348 = vunpack.c.l.b16 %v1337
    %v1349 = vunpack.c.l.b16 %v1338
    %v1350 = vunpack.c.l.b16 %v1339
    %v1351 = vunpack.c.l.b16 %v1340
    %v1352 = vpack.c.b16 %v1349, %v1348
    %v1353 = vpack.c.b16 %v1351, %v1350
    %v1357 = vsel %vm99, %v1342, 0
    %1359 = vmatpush.bf16.msra.mxu0 0
    %1360 = vmatpush.bf16.msra.mxu0 0
    %1361 = vmatpush.bf16.msra.mxu0 0
    %1362 = vmatpush.bf16.msra.mxu0 0
    %1363 = vmatpush.bf16.msra.mxu0 0
    %1364 = vmatpush.bf16.msra.mxu0 0
    %1365 = vmatpush.bf16.msra.mxu0 %v1353
    %1366 = vmatpush.bf16.msra.mxu0 %v1352
    %1367 = vmatmul.bf16.gmra.mxu0 %v1357
    %v1368 = vpop.f32.mrf.mxu0
    %v1369 = vadd.f32 %v1343, %v1368
    %v1370 = vpop.f32.mrf.mxu0
    %v1371 = vadd.f32 %v1343, %v1370
    %1372 = vdwg.mxu0
    %1373 = vst [vmem:[%s3] sm:$0xff] %v1369
    %1374 = vst [vmem:[%s3 + $0x8] sm:$0xff] %v1371
    // Predicated region
    $region26: #{my_transformer_forward.1} parent=1 // pred_check
      _
    $region27: #{my_transformer_forward.1} parent=1 // pred_check_branch
      %1376 = sbr.rel (0) target = $region29
    $region28: #{my_transformer_forward.1} parent=1 // pred_region
      _
    $region29: #{my_transformer_forward.1} parent=1 // pred_fallthru
      _
    // Predicated region
    $region30: #{my_transformer_forward.1} parent=1 // pred_check
      _
    $region31: #{my_transformer_forward.1} parent=1 // pred_check_branch
      %1378 = sbr.rel (0) target = $region33
    $region32: #{my_transformer_forward.1} parent=1 // pred_region
      _
    $region33: #{my_transformer_forward.1} parent=1 // pred_fallthru
      _
    %1379 = vsyncpa [#allocation3], 1
    %1380 = vsyncpa [#allocation5], 1

</llo_original>
